<compile_context>
chip_gen: v7x
topology: tpu7x:2x2x1
jax: 0.10.0
libtpu: 0.0.40
codegen_flags: <defaults>
</compile_context>

<pallas_src>
import functools

import numpy as np
import jax
import jax.numpy as jnp
from jax.experimental import pallas as pl
from jax.experimental.pallas import tpu as pltpu


@functools.lru_cache(maxsize=None)
def _centered_dft_matrix(n: int) -> np.ndarray:
    """M such that  M @ v == fftshift(fft(ifftshift(v), norm='ortho'))."""
    eye = np.eye(n, dtype=np.complex64)
    m = np.fft.fftshift(
        np.fft.fft(np.fft.ifftshift(eye, axes=0), axis=0, norm="ortho"),
        axes=0,
    )
    return m.astype(np.complex64)


def _fft2c_kernel(xr_ref, xi_ref, ar_ref, ai_ref, as_ref,
                  brt_ref, bit_ref, bst_ref, or_ref, oi_ref):
    # One (TN, H, W) batch of complex images per grid step.
    tn, h, w = xr_ref.shape
    f32 = jnp.float32

    dot = lambda a, b: jnp.dot(a, b, preferred_element_type=f32)
    bmm = lambda a, b: jnp.einsum("nhk,nkw->nhw", a, b,
                                  preferred_element_type=f32)

    # ---- Column transform:  y = x @ M_W^T  (contract W) -------------------
    # Flatten the batch into the row dimension -> one big 2D matmul.
    xr = xr_ref[...].reshape(tn * h, w)
    xi = xi_ref[...].reshape(tn * h, w)
    xs = xr + xi                       # VPU add (Gauss trick input sum)

    brt = brt_ref[...]                 # Re(M_W)^T
    bit = bit_ref[...]                 # Im(M_W)^T
    bst = bst_ref[...]                 # (Re+Im)(M_W)^T

    q1 = dot(xr, brt)
    q2 = dot(xi, bit)
    q3 = dot(xs, bst)
    yr = (q1 - q2).reshape(tn, h, w)          # Re(x @ M_W^T)
    yi = (q3 - q1 - q2).reshape(tn, h, w)     # Im(x @ M_W^T)
    ys = yr + yi

    # ---- Row transform:  out = M_H @ y  (contract H), batched over TN -----
    # Broadcasting the (H,H) matrices keeps the batched dot's output directly
    # in (n, h, w) order, avoiding any in-kernel transpose / relayout.
    arb = jnp.broadcast_to(ar_ref[...], (tn, h, h))   # Re(M_H)
    aib = jnp.broadcast_to(ai_ref[...], (tn, h, h))   # Im(M_H)
    asb = jnp.broadcast_to(as_ref[...], (tn, h, h))   # Re+Im

    p1 = bmm(arb, yr)
    p2 = bmm(aib, yi)
    p3 = bmm(asb, ys)

    or_ref[...] = p1 - p2              # real part of M_H @ y
    oi_ref[...] = p3 - p1 - p2         # imag part of M_H @ y


def _pick_grid(n: int, h: int, w: int) -> tuple[int, int]:
    """Return (tn, steps): images per grid step and number of grid steps.

    tn is sized against a conservative VMEM budget (double-buffered in/out
    planes + intermediates + the broadcast (H,H) row matrices), and steps is
    kept >= 2 when possible so the parallel grid axis can use both TensorCores
    on v7x, while padding waste stays < one tile.
    """
    # Per-image f32 bytes per step: ~8 double-buffered in/out planes,
    # ~3 intermediates, and 3 broadcast (H,H) row-transform matrices.
    per_img = 4 * (11 * h * w + 3 * h * h)
    budget = 24 * 1024 * 1024          # comfortably below v7x's 64 MiB VMEM
    tn_cap = max(1, min(512, budget // per_img))
    if n <= 1:
        return 1, 1
    steps = max(2, pl.cdiv(n, tn_cap))         # >= 2 grid steps (2 TCs on v7x)
    tn = pl.cdiv(n, steps)                     # balance work across steps
    steps = pl.cdiv(n, tn)                     # minimize padding
    return int(tn), int(steps)


@jax.jit
def fft2c(x: jnp.ndarray) -> jnp.ndarray:
    """Centered, ortho-normalized 2D FFT over the last two dims (dim=(-2,-1)).

    x: complex64 array of shape (B, C, H, W). Returns complex64 (B, C, H, W).
    Equivalent to torch: fftshift(fft2(ifftshift(x, (-2,-1)), norm='ortho'), (-2,-1)).
    """
    x = x.astype(jnp.complex64)
    B, C, H, W = x.shape
    N = B * C

    xr = jnp.real(x).reshape(N, H, W).astype(jnp.float32)
    xi = jnp.imag(x).reshape(N, H, W).astype(jnp.float32)

    # Centered DFT matrices: host-built numpy constants (folded at compile time).
    mh = _centered_dft_matrix(H)                       # (H, H) complex
    mw = _centered_dft_matrix(W)                       # (W, W) complex
    ar = jnp.asarray(np.real(mh), dtype=jnp.float32)   # Re(M_H)
    ai = jnp.asarray(np.imag(mh), dtype=jnp.float32)   # Im(M_H)
    asum = ar + ai                                     # Gauss-trick sum matrix
    brt = jnp.asarray(np.real(mw).T, dtype=jnp.float32)   # Re(M_W)^T
    bit = jnp.asarray(np.imag(mw).T, dtype=jnp.float32)   # Im(M_W)^T
    bst = brt + bit

    tn, steps = _pick_grid(N, H, W)
    n_pad = tn * steps
    if n_pad != N:
        pad = ((0, n_pad - N), (0, 0), (0, 0))
        xr = jnp.pad(xr, pad)
        xi = jnp.pad(xi, pad)

    out_r, out_i = pl.pallas_call(
        _fft2c_kernel,
        out_shape=(
            jax.ShapeDtypeStruct((n_pad, H, W), jnp.float32),
            jax.ShapeDtypeStruct((n_pad, H, W), jnp.float32),
        ),
        grid_spec=pltpu.PrefetchScalarGridSpec(
            num_scalar_prefetch=0,
            grid=(steps,),
            in_specs=[
                pl.BlockSpec((tn, H, W), lambda i: (i, 0, 0)),   # xr
                pl.BlockSpec((tn, H, W), lambda i: (i, 0, 0)),   # xi
                pl.BlockSpec((H, H), lambda i: (0, 0)),          # Re(M_H)
                pl.BlockSpec((H, H), lambda i: (0, 0)),          # Im(M_H)
                pl.BlockSpec((H, H), lambda i: (0, 0)),          # Re+Im(M_H)
                pl.BlockSpec((W, W), lambda i: (0, 0)),          # Re(M_W)^T
                pl.BlockSpec((W, W), lambda i: (0, 0)),          # Im(M_W)^T
                pl.BlockSpec((W, W), lambda i: (0, 0)),          # (Re+Im)(M_W)^T
            ],
            out_specs=[
                pl.BlockSpec((tn, H, W), lambda i: (i, 0, 0)),
                pl.BlockSpec((tn, H, W), lambda i: (i, 0, 0)),
            ],
        ),
        compiler_params=pltpu.CompilerParams(
            dimension_semantics=("parallel",),
            vmem_limit_bytes=48 * 1024 * 1024,
        ),
    )(xr, xi, ar, ai, asum, brt, bit, bst)

    out = jax.lax.complex(out_r[:N], out_i[:N])
    return out.reshape(B, C, H, W)


def fft2c_reference(x: jnp.ndarray) -> jnp.ndarray:
    return jnp.fft.fftshift(
        jnp.fft.fft2(jnp.fft.ifftshift(x, axes=(-2, -1)),
                     axes=(-2, -1), norm="ortho"),
        axes=(-2, -1),
    )


if __name__ == "__main__":
    B, C, H, W = 2, 4, 16, 16
    key = jax.random.PRNGKey(0)
    kr, ki = jax.random.split(key)
    x = (jax.random.normal(kr, (B, C, H, W), dtype=jnp.float32)
         + 1j * jax.random.normal(ki, (B, C, H, W), dtype=jnp.float32)
         ).astype(jnp.complex64)

    out = fft2c(x)
    out = jax.block_until_ready(out)

    ref = fft2c_reference(x)
    assert out.shape == (B, C, H, W) and out.dtype == jnp.complex64
    assert jnp.allclose(out, ref, atol=1e-3, rtol=1e-3), "mismatch vs reference FFT"

    print("KERNEL_OK")
</pallas_src>

<mosaic_0001>
module attributes {stable_mosaic.version = 11 : i64} {
  func.func @_fft2c_kernel(%arg0: i32, %arg1: memref<4x16x16xf32, #tpu.memory_space<vmem>>, %arg2: memref<4x16x16xf32, #tpu.memory_space<vmem>>, %arg3: memref<16x16xf32, #tpu.memory_space<vmem>>, %arg4: memref<16x16xf32, #tpu.memory_space<vmem>>, %arg5: memref<16x16xf32, #tpu.memory_space<vmem>>, %arg6: memref<16x16xf32, #tpu.memory_space<vmem>>, %arg7: memref<16x16xf32, #tpu.memory_space<vmem>>, %arg8: memref<16x16xf32, #tpu.memory_space<vmem>>, %arg9: memref<4x16x16xf32, #tpu.memory_space<vmem>>, %arg10: memref<4x16x16xf32, #tpu.memory_space<vmem>>) attributes {dimension_semantics = [#tpu.dimension_semantics<parallel>], iteration_bounds = array<i64: 2>, scalar_prefetch = 0 : i64, scratch_operands = 0 : i64, tpu.core_type = #tpu.core_type<tc>, window_params = [{transform_indices = @transform_0, window_bounds = array<i64: 4, 16, 16>}, {transform_indices = @transform_1, window_bounds = array<i64: 4, 16, 16>}, {pipeline_mode = #tpu.pipeline_mode<synchronous>, transform_indices = @transform_2, window_bounds = array<i64: 16, 16>}, {pipeline_mode = #tpu.pipeline_mode<synchronous>, transform_indices = @transform_3, window_bounds = array<i64: 16, 16>}, {pipeline_mode = #tpu.pipeline_mode<synchronous>, transform_indices = @transform_4, window_bounds = array<i64: 16, 16>}, {pipeline_mode = #tpu.pipeline_mode<synchronous>, transform_indices = @transform_5, window_bounds = array<i64: 16, 16>}, {pipeline_mode = #tpu.pipeline_mode<synchronous>, transform_indices = @transform_6, window_bounds = array<i64: 16, 16>}, {pipeline_mode = #tpu.pipeline_mode<synchronous>, transform_indices = @transform_7, window_bounds = array<i64: 16, 16>}, {transform_indices = @transform_8, window_bounds = array<i64: 4, 16, 16>}, {transform_indices = @transform_9, window_bounds = array<i64: 4, 16, 16>}]} {
    %c0 = arith.constant 0 : index
    %c0_0 = arith.constant 0 : index
    %c0_1 = arith.constant 0 : index
    %0 = vector.load %arg1[%c0, %c0_0, %c0_1] : memref<4x16x16xf32, #tpu.memory_space<vmem>>, vector<4x16x16xf32>
    %1 = vector.shape_cast %0 : vector<4x16x16xf32> to vector<64x16xf32>
    %c0_2 = arith.constant 0 : index
    %c0_3 = arith.constant 0 : index
    %c0_4 = arith.constant 0 : index
    %2 = vector.load %arg2[%c0_2, %c0_3, %c0_4] : memref<4x16x16xf32, #tpu.memory_space<vmem>>, vector<4x16x16xf32>
    %3 = vector.shape_cast %2 : vector<4x16x16xf32> to vector<64x16xf32>
    %4 = arith.addf %1, %3 : vector<64x16xf32>
    %c0_5 = arith.constant 0 : index
    %c0_6 = arith.constant 0 : index
    %5 = vector.load %arg6[%c0_5, %c0_6] : memref<16x16xf32, #tpu.memory_space<vmem>>, vector<16x16xf32>
    %c0_7 = arith.constant 0 : index
    %c0_8 = arith.constant 0 : index
    %6 = vector.load %arg7[%c0_7, %c0_8] : memref<16x16xf32, #tpu.memory_space<vmem>>, vector<16x16xf32>
    %c0_9 = arith.constant 0 : index
    %c0_10 = arith.constant 0 : index
    %7 = vector.load %arg8[%c0_9, %c0_10] : memref<16x16xf32, #tpu.memory_space<vmem>>, vector<16x16xf32>
    %cst = arith.constant dense<0.000000e+00> : vector<64x16xf32>
    %8 = tpu.matmul %1, %5, %cst {dimension_numbers = #tpu.dot_dimension_numbers<[1], [0], [0], [1], [0, 0, 1, 1], [], []>} : vector<64x16xf32>, vector<16x16xf32>, vector<64x16xf32> -> vector<64x16xf32>
    %cst_11 = arith.constant dense<0.000000e+00> : vector<64x16xf32>
    %9 = tpu.matmul %3, %6, %cst_11 {dimension_numbers = #tpu.dot_dimension_numbers<[1], [0], [0], [1], [0, 0, 1, 1], [], []>} : vector<64x16xf32>, vector<16x16xf32>, vector<64x16xf32> -> vector<64x16xf32>
    %cst_12 = arith.constant dense<0.000000e+00> : vector<64x16xf32>
    %10 = tpu.matmul %4, %7, %cst_12 {dimension_numbers = #tpu.dot_dimension_numbers<[1], [0], [0], [1], [0, 0, 1, 1], [], []>} : vector<64x16xf32>, vector<16x16xf32>, vector<64x16xf32> -> vector<64x16xf32>
    %11 = arith.subf %8, %9 : vector<64x16xf32>
    %12 = vector.shape_cast %11 : vector<64x16xf32> to vector<4x16x16xf32>
    %13 = arith.subf %10, %8 : vector<64x16xf32>
    %14 = arith.subf %13, %9 : vector<64x16xf32>
    %15 = vector.shape_cast %14 : vector<64x16xf32> to vector<4x16x16xf32>
    %16 = arith.addf %12, %15 : vector<4x16x16xf32>
    %c0_13 = arith.constant 0 : index
    %c0_14 = arith.constant 0 : index
    %17 = vector.load %arg3[%c0_13, %c0_14] : memref<16x16xf32, #tpu.memory_space<vmem>>, vector<16x16xf32>
    %18 = vector.shape_cast %17 : vector<16x16xf32> to vector<1x16x16xf32>
    %19 = vector.broadcast %18 : vector<1x16x16xf32> to vector<4x16x16xf32>
    %c0_15 = arith.constant 0 : index
    %c0_16 = arith.constant 0 : index
    %20 = vector.load %arg4[%c0_15, %c0_16] : memref<16x16xf32, #tpu.memory_space<vmem>>, vector<16x16xf32>
    %21 = vector.shape_cast %20 : vector<16x16xf32> to vector<1x16x16xf32>
    %22 = vector.broadcast %21 : vector<1x16x16xf32> to vector<4x16x16xf32>
    %c0_17 = arith.constant 0 : index
    %c0_18 = arith.constant 0 : index
    %23 = vector.load %arg5[%c0_17, %c0_18] : memref<16x16xf32, #tpu.memory_space<vmem>>, vector<16x16xf32>
    %24 = vector.shape_cast %23 : vector<16x16xf32> to vector<1x16x16xf32>
    %25 = vector.broadcast %24 : vector<1x16x16xf32> to vector<4x16x16xf32>
    "tpu.trace_start"() <{level = 10 : i32, message = "nhk,nkw->nhw"}> : () -> ()
    %cst_19 = arith.constant dense<0.000000e+00> : vector<4x16x16xf32>
    %26 = tpu.matmul %19, %12, %cst_19 {dimension_numbers = #tpu.dot_dimension_numbers<[2], [1], [1], [2], [0, 0, 0, 1, 1, 2], [0], [0]>} : vector<4x16x16xf32>, vector<4x16x16xf32>, vector<4x16x16xf32> -> vector<4x16x16xf32>
    %cst_20 = arith.constant dense<0.000000e+00> : vector<4x16x16xf32>
    %27 = tpu.matmul %22, %15, %cst_20 {dimension_numbers = #tpu.dot_dimension_numbers<[2], [1], [1], [2], [0, 0, 0, 1, 1, 2], [0], [0]>} : vector<4x16x16xf32>, vector<4x16x16xf32>, vector<4x16x16xf32> -> vector<4x16x16xf32>
    %cst_21 = arith.constant dense<0.000000e+00> : vector<4x16x16xf32>
    %28 = tpu.matmul %25, %16, %cst_21 {dimension_numbers = #tpu.dot_dimension_numbers<[2], [1], [1], [2], [0, 0, 0, 1, 1, 2], [0], [0]>} : vector<4x16x16xf32>, vector<4x16x16xf32>, vector<4x16x16xf32> -> vector<4x16x16xf32>
    "tpu.trace_stop"() : () -> ()
    %29 = arith.subf %26, %27 : vector<4x16x16xf32>
    %c0_22 = arith.constant 0 : index
    %c0_23 = arith.constant 0 : index
    %c0_24 = arith.constant 0 : index
    %30 = vector.load %arg9[%c0_22, %c0_23, %c0_24] : memref<4x16x16xf32, #tpu.memory_space<vmem>>, vector<4x16x16xf32>
    tpu.vector_store %arg9[%c0_22, %c0_23, %c0_24], %29 {strides = array<i32>} : memref<4x16x16xf32, #tpu.memory_space<vmem>>, vector<4x16x16xf32>,
    %31 = arith.subf %28, %26 : vector<4x16x16xf32>
    %32 = arith.subf %31, %27 : vector<4x16x16xf32>
    %c0_25 = arith.constant 0 : index
    %c0_26 = arith.constant 0 : index
    %c0_27 = arith.constant 0 : index
    %33 = vector.load %arg10[%c0_25, %c0_26, %c0_27] : memref<4x16x16xf32, #tpu.memory_space<vmem>>, vector<4x16x16xf32>
    tpu.vector_store %arg10[%c0_25, %c0_26, %c0_27], %32 {strides = array<i32>} : memref<4x16x16xf32, #tpu.memory_space<vmem>>, vector<4x16x16xf32>,
    return
  }
  func.func @transform_0(%arg0: i32) -> (i32, i32, i32) {
    %c0_i32 = arith.constant 0 : i32
    %c0_i32_0 = arith.constant 0 : i32
    %c0_i32_1 = arith.constant 0 : i32
    return %arg0, %c0_i32, %c0_i32_0 : i32, i32, i32
  }
  func.func @transform_1(%arg0: i32) -> (i32, i32, i32) {
    %c0_i32 = arith.constant 0 : i32
    %c0_i32_0 = arith.constant 0 : i32
    %c0_i32_1 = arith.constant 0 : i32
    return %arg0, %c0_i32, %c0_i32_0 : i32, i32, i32
  }
  func.func @transform_2(%arg0: i32) -> (i32, i32) {
    %c0_i32 = arith.constant 0 : i32
    %c0_i32_0 = arith.constant 0 : i32
    %c0_i32_1 = arith.constant 0 : i32
    return %c0_i32, %c0_i32_0 : i32, i32
  }
  func.func @transform_3(%arg0: i32) -> (i32, i32) {
    %c0_i32 = arith.constant 0 : i32
    %c0_i32_0 = arith.constant 0 : i32
    %c0_i32_1 = arith.constant 0 : i32
    return %c0_i32, %c0_i32_0 : i32, i32
  }
  func.func @transform_4(%arg0: i32) -> (i32, i32) {
    %c0_i32 = arith.constant 0 : i32
    %c0_i32_0 = arith.constant 0 : i32
    %c0_i32_1 = arith.constant 0 : i32
    return %c0_i32, %c0_i32_0 : i32, i32
  }
  func.func @transform_5(%arg0: i32) -> (i32, i32) {
    %c0_i32 = arith.constant 0 : i32
    %c0_i32_0 = arith.constant 0 : i32
    %c0_i32_1 = arith.constant 0 : i32
    return %c0_i32, %c0_i32_0 : i32, i32
  }
  func.func @transform_6(%arg0: i32) -> (i32, i32) {
    %c0_i32 = arith.constant 0 : i32
    %c0_i32_0 = arith.constant 0 : i32
    %c0_i32_1 = arith.constant 0 : i32
    return %c0_i32, %c0_i32_0 : i32, i32
  }
  func.func @transform_7(%arg0: i32) -> (i32, i32) {
    %c0_i32 = arith.constant 0 : i32
    %c0_i32_0 = arith.constant 0 : i32
    %c0_i32_1 = arith.constant 0 : i32
    return %c0_i32, %c0_i32_0 : i32, i32
  }
  func.func @transform_8(%arg0: i32) -> (i32, i32, i32) {
    %c0_i32 = arith.constant 0 : i32
    %c0_i32_0 = arith.constant 0 : i32
    %c0_i32_1 = arith.constant 0 : i32
    return %arg0, %c0_i32, %c0_i32_0 : i32, i32, i32
  }
  func.func @transform_9(%arg0: i32) -> (i32, i32, i32) {
    %c0_i32 = arith.constant 0 : i32
    %c0_i32_0 = arith.constant 0 : i32
    %c0_i32_1 = arith.constant 0 : i32
    return %arg0, %c0_i32, %c0_i32_0 : i32, i32, i32
  }
}

</mosaic_0001>

<llo_original>
// kernel: custom-call.1
$region0: #{custom-call.1}
  %s0 = inlined_call_operand.hbm [shape: c64[2,4,16,16], index: 0, kind: input, shape index: {}]
  %s1 = inlined_call_operand.vmem [shape: f32[2,4,16,16], index: 1, kind: output, shape index: {}]
  %s2 = scalar_lea.hbm %s0, 2048
  $region1: #{custom-call.1} parent=0
    #allocation0 [shape = 's32[1]{0}', space=sflag, size = 0x4, scoped, tag = 'scoped memory for custom-call.1']
    %3 = vsyncpa [#allocation0], 0
    %s4 = sshll.u32 %s1, 4
    %s5 = int_to_ptr.vmem [resolvable:$true] %s4
    %7 = dma.hbm_to_vmem [thread:$0]  %s2, 2048, %s5, [#allocation0]
    %8 = dma.done [#allocation0], 2048
    %9 = vsyncpa [#allocation0], 1

// kernel: custom-call.2
$region0: #{custom-call.2}
  %s0 = inlined_call_operand.vmem [shape: f32[2,4,16,16], index: 0, kind: input, shape index: {}]
  %s1 = inlined_call_operand.vmem [shape: f32[2,4,16,16], index: 1, kind: input, shape index: {}]
  %s2 = inlined_call_operand.hbm [shape: c64[2,4,16,16], index: 2, kind: output, shape index: {}]
  %s3 = scalar_lea.hbm %s2, 2048
  $region1: #{custom-call.2} parent=0
    #allocation0 [shape = 's32[1]{0}', space=sflag, size = 0x4, scoped, tag = 'scoped memory for custom-call.2']
    %4 = vsyncpa [#allocation0], 0
    %s5 = sshll.u32 %s0, 4
    %s6 = int_to_ptr.vmem [resolvable:$true] %s5
    %8 = dma.vmem_to_hbm [thread:$0]  %s6, 2048, %s2, [#allocation0]
    %9 = dma.done [#allocation0], 2048
    %10 = vsyncpa [#allocation0], 1
  $region2: #{custom-call.2} parent=0
    #allocation1 [shape = 's32[1]{0}', space=sflag, size = 0x4, scoped, tag = 'scoped memory for custom-call.2']
    %11 = vsyncpa [#allocation1], 0
    %s12 = sshll.u32 %s1, 4
    %s13 = int_to_ptr.vmem [resolvable:$true] %s12
    %15 = dma.vmem_to_hbm [thread:$0]  %s13, 2048, %s3, [#allocation1]
    %16 = dma.done [#allocation1], 2048
    %17 = vsyncpa [#allocation1], 1

// kernel: custom-call
$region0: #{custom-call}
  %s0 = inlined_call_operand.hbm [shape: c64[2,4,16,16], index: 0, kind: input, shape index: {}]
  %s1 = inlined_call_operand.vmem [shape: f32[2,4,16,16], index: 1, kind: output, shape index: {}]
  $region1: #{custom-call} parent=0
    #allocation0 [shape = 's32[1]{0}', space=sflag, size = 0x4, scoped, tag = 'scoped memory for custom-call']
    %2 = vsyncpa [#allocation0], 0
    %s3 = sshll.u32 %s1, 4
    %s4 = int_to_ptr.vmem [resolvable:$true] %s3
    %6 = dma.hbm_to_vmem [thread:$0]  %s0, 2048, %s4, [#allocation0]
    %7 = dma.done [#allocation0], 2048
    %8 = vsyncpa [#allocation0], 1

// kernel: fft2c.1
$region0: #{fft2c.1}
  #allocation0 [shape = 'u32[]', space=smem, size = 0x4, offset = 0x4, fixed_abs, tag = 'smem constant byte address 0x4 - core index']
  #allocation1 [shape = 'u32[144,128]{1,0:T(1,128)}', space=vmem, size = 0x12000, scoped, tag = 'internal scratch']
  %s0 = inlined_call_operand.vmem [shape: f32[8,16,16], index: 0, kind: input, shape index: {}]
  %s1 = inlined_call_operand.vmem [shape: f32[8,16,16], index: 1, kind: input, shape index: {}]
  %s2 = inlined_call_operand.hbm [shape: f32[16,16], index: 2, kind: input, shape index: {}]
  %s3 = inlined_call_operand.hbm [shape: f32[16,16], index: 3, kind: input, shape index: {}]
  %s4 = inlined_call_operand.hbm [shape: f32[16,16], index: 4, kind: input, shape index: {}]
  %s5 = inlined_call_operand.hbm [shape: f32[16,16], index: 5, kind: input, shape index: {}]
  %s6 = inlined_call_operand.vmem [shape: f32[16,16], index: 6, kind: input, shape index: {}]
  %s7 = inlined_call_operand.vmem [shape: f32[16,16], index: 7, kind: input, shape index: {}]
  %s8 = inlined_call_operand.vmem [shape: f32[8,16,16], index: 8, kind: output, shape index: {0}]
  %s9 = inlined_call_operand.vmem [shape: f32[8,16,16], index: 9, kind: output, shape index: {1}]
  %10 = xla_tuple %s8, %s9
  %s11 = sld [smem:[#allocation0]]
  $region89: #{fft2c.1} parent=0
    _
  %s13 = ssub.s32 1, %s11
  %s14 = scalar_select 0, %s13, %s11
  $region1: #{fft2c.1} parent=0
    #allocation2 [shape = 'u8[8192]{0}', space=vmem, size = 0x2000, scoped, tag = 'input window, operand 2, single buffered']
    #allocation3 [shape = 's32[2]{0}', space=sflag, size = 0x8, scoped, tag = 'scoped memory for fft2c.1']
    #allocation4 [shape = 'u8[8192]{0}', space=vmem, size = 0x2000, scoped, tag = 'input window, operand 3, single buffered']
    #allocation5 [shape = 's32[1]{0}', space=sflag, size = 0x4, scoped, tag = 'scoped memory for fft2c.1']
    #allocation6 [shape = 'u8[8192]{0}', space=vmem, size = 0x2000, scoped, tag = 'input window, operand 4, single buffered']
    #allocation7 [shape = 'u8[8192]{0}', space=vmem, size = 0x2000, scoped, tag = 'input window, operand 5, single buffered']
    #allocation8 [shape = 's32[1]{0}', space=sflag, size = 0x4, scoped, tag = 'scoped memory for fft2c.1']
    %15 = vsyncpa [#allocation3], 0
    %16 = vsyncpa [#allocation5], 0
    %17 = vsyncpa [#allocation8], 0
    loop: start=0, step=1, limit=4
    $region2: #{fft2c.1} parent=1 // loop_pre_header
      _
    $region3: #{fft2c.1} parent=1 // loop_header
      %s19 = sphi 0, %s23
      %p20 = scmp.ge.s32.totalorder %s19, 4
      %s29 = sphi 0, %s31
      %s32 = sphi 0, %s29
      %s33 = sphi 0, %s32
      %s49 = sphi 0, %s33
      %s55 = sphi 0, %s57
      %s58 = sphi 0, %s55
      %s59 = sphi 0, %s58
      %s75 = sphi 0, %s59
      %s79 = sphi 0, %s79
      %s81 = sphi 0, %s79
      %s82 = sphi 0, %s81
      %s96 = sphi 0, %s82
      %s100 = sphi 0, %s100
      %s102 = sphi 0, %s100
      %s103 = sphi 0, %s102
      %s117 = sphi 0, %s103
      %s121 = sphi 0, %s121
      %s123 = sphi 0, %s121
      %s124 = sphi 0, %s123
      %s138 = sphi 0, %s124
      %s142 = sphi 0, %s142
      %s144 = sphi 0, %s142
      %s145 = sphi 0, %s144
      %s159 = sphi 0, %s145
      %s163 = sphi 0, %s163
      %s165 = sphi 0, %s163
      %s166 = sphi 0, %s165
      %s180 = sphi 0, %s166
      %s184 = sphi 0, %s184
      %s186 = sphi 0, %s184
      %s187 = sphi 0, %s186
      %s201 = sphi 0, %s187
      %s207 = sphi 0, %s209
      %s210 = sphi 0, %s207
      %s211 = sphi 0, %s210
      %s227 = sphi 0, %s211
      %s233 = sphi 0, %s235
      %s236 = sphi 0, %s233
      %s237 = sphi 0, %s236
      %s253 = sphi 0, %s237
    $region4: #{fft2c.1} parent=1 // loop_header_branch
      %22 = sbr.rel (%p20) target = $region8
    $region5: #{fft2c.1} parent=1 // loop_body
      %s24 = ssub.s32 %s19, 1
      %s25 = ssub.s32 %s19, 2
      %s26 = sadd.s32 %s19, 1
      %s27 = ssub.s32 %s19, %s26
      %p28 = scmp.eq.s32.totalorder %s27, 0
      %s30 = sadd.s32 %s29, 1
      %s31 = scalar_select %p28, %s29, %s30
      %p34 = pneg %p28
      %p35 = scmp.eq.s32.totalorder %s19, 1
      %p36 = por %p34, %p35
      %p37 = scmp.ne.s32.totalorder %s29, %s32
      %p38 = scmp.eq.s32.totalorder %s19, 0
      %p39 = por %p37, %p38
      %p40 = scmp.ne.s32.totalorder %s29, %s32
      %p41 = scmp.eq.s32.totalorder %s24, 1
      %p42 = por %p40, %p41
      %p43 = scmp.ne.s32.totalorder %s32, %s33
      %p44 = scmp.eq.s32.totalorder %s24, 0
      %p45 = por %p43, %p44
      %p46 = scmp.ne.s32.totalorder %s32, %s33
      %p47 = scmp.eq.s32.totalorder %s25, 1
      %p48 = por %p46, %p47
      %p50 = scmp.ne.s32.totalorder %s33, %s49
      %p51 = scmp.eq.s32.totalorder %s25, 0
      %p52 = por %p50, %p51
      %s53 = ssub.s32 %s19, %s26
      %p54 = scmp.eq.s32.totalorder %s53, 0
      %s56 = sadd.s32 %s55, 1
      %s57 = scalar_select %p54, %s55, %s56
      %p60 = pneg %p54
      %p61 = scmp.eq.s32.totalorder %s19, 1
      %p62 = por %p60, %p61
      %p63 = scmp.ne.s32.totalorder %s55, %s58
      %p64 = scmp.eq.s32.totalorder %s19, 0
      %p65 = por %p63, %p64
      %p66 = scmp.ne.s32.totalorder %s55, %s58
      %p67 = scmp.eq.s32.totalorder %s24, 1
      %p68 = por %p66, %p67
      %p69 = scmp.ne.s32.totalorder %s58, %s59
      %p70 = scmp.eq.s32.totalorder %s24, 0
      %p71 = por %p69, %p70
      %p72 = scmp.ne.s32.totalorder %s58, %s59
      %p73 = scmp.eq.s32.totalorder %s25, 1
      %p74 = por %p72, %p73
      %p76 = scmp.ne.s32.totalorder %s59, %s75
      %p77 = scmp.eq.s32.totalorder %s25, 0
      %p78 = por %p76, %p77
      %s80 = sadd.s32 %s79, 1
      %p83 = scmp.eq.s32.totalorder %s19, 1
      %p84 = scmp.ne.s32.totalorder %s79, %s81
      %p85 = scmp.eq.s32.totalorder %s19, 0
      %p86 = por %p84, %p85
      %p87 = scmp.ne.s32.totalorder %s79, %s81
      %p88 = scmp.eq.s32.totalorder %s24, 1
      %p89 = por %p87, %p88
      %p90 = scmp.ne.s32.totalorder %s81, %s82
      %p91 = scmp.eq.s32.totalorder %s24, 0
      %p92 = por %p90, %p91
      %p93 = scmp.ne.s32.totalorder %s81, %s82
      %p94 = scmp.eq.s32.totalorder %s25, 1
      %p95 = por %p93, %p94
      %p97 = scmp.ne.s32.totalorder %s82, %s96
      %p98 = scmp.eq.s32.totalorder %s25, 0
      %p99 = por %p97, %p98
      %s101 = sadd.s32 %s100, 1
      %p104 = scmp.eq.s32.totalorder %s19, 1
      %p105 = scmp.ne.s32.totalorder %s100, %s102
      %p106 = scmp.eq.s32.totalorder %s19, 0
      %p107 = por %p105, %p106
      %p108 = scmp.ne.s32.totalorder %s100, %s102
      %p109 = scmp.eq.s32.totalorder %s24, 1
      %p110 = por %p108, %p109
      %p111 = scmp.ne.s32.totalorder %s102, %s103
      %p112 = scmp.eq.s32.totalorder %s24, 0
      %p113 = por %p111, %p112
      %p114 = scmp.ne.s32.totalorder %s102, %s103
      %p115 = scmp.eq.s32.totalorder %s25, 1
      %p116 = por %p114, %p115
      %p118 = scmp.ne.s32.totalorder %s103, %s117
      %p119 = scmp.eq.s32.totalorder %s25, 0
      %p120 = por %p118, %p119
      %s122 = sadd.s32 %s121, 1
      %p125 = scmp.eq.s32.totalorder %s19, 1
      %p126 = scmp.ne.s32.totalorder %s121, %s123
      %p127 = scmp.eq.s32.totalorder %s19, 0
      %p128 = por %p126, %p127
      %p129 = scmp.ne.s32.totalorder %s121, %s123
      %p130 = scmp.eq.s32.totalorder %s24, 1
      %p131 = por %p129, %p130
      %p132 = scmp.ne.s32.totalorder %s123, %s124
      %p133 = scmp.eq.s32.totalorder %s24, 0
      %p134 = por %p132, %p133
      %p135 = scmp.ne.s32.totalorder %s123, %s124
      %p136 = scmp.eq.s32.totalorder %s25, 1
      %p137 = por %p135, %p136
      %p139 = scmp.ne.s32.totalorder %s124, %s138
      %p140 = scmp.eq.s32.totalorder %s25, 0
      %p141 = por %p139, %p140
      %s143 = sadd.s32 %s142, 1
      %p146 = scmp.eq.s32.totalorder %s19, 1
      %p147 = scmp.ne.s32.totalorder %s142, %s144
      %p148 = scmp.eq.s32.totalorder %s19, 0
      %p149 = por %p147, %p148
      %p150 = scmp.ne.s32.totalorder %s142, %s144
      %p151 = scmp.eq.s32.totalorder %s24, 1
      %p152 = por %p150, %p151
      %p153 = scmp.ne.s32.totalorder %s144, %s145
      %p154 = scmp.eq.s32.totalorder %s24, 0
      %p155 = por %p153, %p154
      %p156 = scmp.ne.s32.totalorder %s144, %s145
      %p157 = scmp.eq.s32.totalorder %s25, 1
      %p158 = por %p156, %p157
      %p160 = scmp.ne.s32.totalorder %s145, %s159
      %p161 = scmp.eq.s32.totalorder %s25, 0
      %p162 = por %p160, %p161
      %s164 = sadd.s32 %s163, 1
      %p167 = scmp.eq.s32.totalorder %s19, 1
      %p168 = scmp.ne.s32.totalorder %s163, %s165
      %p169 = scmp.eq.s32.totalorder %s19, 0
      %p170 = por %p168, %p169
      %p171 = scmp.ne.s32.totalorder %s163, %s165
      %p172 = scmp.eq.s32.totalorder %s24, 1
      %p173 = por %p171, %p172
      %p174 = scmp.ne.s32.totalorder %s165, %s166
      %p175 = scmp.eq.s32.totalorder %s24, 0
      %p176 = por %p174, %p175
      %p177 = scmp.ne.s32.totalorder %s165, %s166
      %p178 = scmp.eq.s32.totalorder %s25, 1
      %p179 = por %p177, %p178
      %p181 = scmp.ne.s32.totalorder %s166, %s180
      %p182 = scmp.eq.s32.totalorder %s25, 0
      %p183 = por %p181, %p182
      %s185 = sadd.s32 %s184, 1
      %p188 = scmp.eq.s32.totalorder %s19, 1
      %p189 = scmp.ne.s32.totalorder %s184, %s186
      %p190 = scmp.eq.s32.totalorder %s19, 0
      %p191 = por %p189, %p190
      %p192 = scmp.ne.s32.totalorder %s184, %s186
      %p193 = scmp.eq.s32.totalorder %s24, 1
      %p194 = por %p192, %p193
      %p195 = scmp.ne.s32.totalorder %s186, %s187
      %p196 = scmp.eq.s32.totalorder %s24, 0
      %p197 = por %p195, %p196
      %p198 = scmp.ne.s32.totalorder %s186, %s187
      %p199 = scmp.eq.s32.totalorder %s25, 1
      %p200 = por %p198, %p199
      %p202 = scmp.ne.s32.totalorder %s187, %s201
      %p203 = scmp.eq.s32.totalorder %s25, 0
      %p204 = por %p202, %p203
      %s205 = ssub.s32 %s19, %s26
      %p206 = scmp.eq.s32.totalorder %s205, 0
      %s208 = sadd.s32 %s207, 1
      %s209 = scalar_select %p206, %s207, %s208
      %p212 = pneg %p206
      %p213 = scmp.eq.s32.totalorder %s19, 1
      %p214 = por %p212, %p213
      %p215 = scmp.ne.s32.totalorder %s207, %s210
      %p216 = scmp.eq.s32.totalorder %s19, 0
      %p217 = por %p215, %p216
      %p218 = scmp.ne.s32.totalorder %s207, %s210
      %p219 = scmp.eq.s32.totalorder %s24, 1
      %p220 = por %p218, %p219
      %p221 = scmp.ne.s32.totalorder %s210, %s211
      %p222 = scmp.eq.s32.totalorder %s24, 0
      %p223 = por %p221, %p222
      %p224 = scmp.ne.s32.totalorder %s210, %s211
      %p225 = scmp.eq.s32.totalorder %s25, 1
      %p226 = por %p224, %p225
      %p228 = scmp.ne.s32.totalorder %s211, %s227
      %p229 = scmp.eq.s32.totalorder %s25, 0
      %p230 = por %p228, %p229
      %s231 = ssub.s32 %s19, %s26
      %p232 = scmp.eq.s32.totalorder %s231, 0
      %s234 = sadd.s32 %s233, 1
      %s235 = scalar_select %p232, %s233, %s234
      %p238 = pneg %p232
      %p239 = scmp.eq.s32.totalorder %s19, 1
      %p240 = por %p238, %p239
      %p241 = scmp.ne.s32.totalorder %s233, %s236
      %p242 = scmp.eq.s32.totalorder %s19, 0
      %p243 = por %p241, %p242
      %p244 = scmp.ne.s32.totalorder %s233, %s236
      %p245 = scmp.eq.s32.totalorder %s24, 1
      %p246 = por %p244, %p245
      %p247 = scmp.ne.s32.totalorder %s236, %s237
      %p248 = scmp.eq.s32.totalorder %s24, 0
      %p249 = por %p247, %p248
      %p250 = scmp.ne.s32.totalorder %s236, %s237
      %p251 = scmp.eq.s32.totalorder %s25, 1
      %p252 = por %p250, %p251
      %p254 = scmp.ne.s32.totalorder %s237, %s253
      %p255 = scmp.eq.s32.totalorder %s25, 0
      %p256 = por %p254, %p255
      %p257 = scmp.le.s32.totalorder 1, %s19
      %p258 = scmp.lt.s32.totalorder %s19, 3
      %p259 = pnand %p257, %p258
      %p260 = pneg %p259
      // Predicated region
      $region9: #{fft2c.1} parent=5 // pred_check
        _
      $region10: #{fft2c.1} parent=5 // pred_check_branch
        %262 = sbr.rel (%p259) target = $region12
      $region11: #{fft2c.1} parent=5 // pred_region
        %s263 = ssub.s32 %s19, 1
        // Predicated region
        $region13: #{fft2c.1} parent=11 // pred_check
          %p264 = pneg %p92
        $region14: #{fft2c.1} parent=11 // pred_check_branch
          %266 = sbr.rel (%p264) target = $region16
        $region15: #{fft2c.1} parent=11 // pred_region
          %s268 = ssub.s32 256, 256
          %269 = vsyncadd [#allocation3], %s268
          %s270 = sshll.u32 [#allocation2], 4
          %s271 = int_to_ptr.vmem [resolvable:$true] %s270
          %276 = dma.hbm_to_vmem [thread:$0]  %s2, 256, %s271, [#allocation3], 128, 128, 8
        $region16: #{fft2c.1} parent=11 // pred_fallthru
          _
        // Predicated region
        $region17: #{fft2c.1} parent=11 // pred_check
          %p277 = pneg %p113
        $region18: #{fft2c.1} parent=11 // pred_check_branch
          %279 = sbr.rel (%p277) target = $region20
        $region19: #{fft2c.1} parent=11 // pred_region
          %s281 = ssub.s32 256, 256
          %282 = vsyncadd [#allocation5], %s281
          %s283 = sshll.u32 [#allocation4], 4
          %s284 = int_to_ptr.vmem [resolvable:$true] %s283
          %289 = dma.hbm_to_vmem [thread:$0]  %s3, 256, %s284, [#allocation5], 128, 128, 8
        $region20: #{fft2c.1} parent=11 // pred_fallthru
          _
        // Predicated region
        $region21: #{fft2c.1} parent=11 // pred_check
          %p290 = pneg %p134
        $region22: #{fft2c.1} parent=11 // pred_check_branch
          %292 = sbr.rel (%p290) target = $region24
        $region23: #{fft2c.1} parent=11 // pred_region
          %s294 = ssub.s32 256, 256
          %295 = vsyncadd [#allocation5], %s294
          %s296 = sshll.u32 [#allocation6], 4
          %s297 = int_to_ptr.vmem [resolvable:$true] %s296
          %302 = dma.hbm_to_vmem [thread:$0]  %s4, 256, %s297, [#allocation5], 128, 128, 8
        $region24: #{fft2c.1} parent=11 // pred_fallthru
          _
        // Predicated region
        $region25: #{fft2c.1} parent=11 // pred_check
          %p303 = pneg %p155
        $region26: #{fft2c.1} parent=11 // pred_check_branch
          %305 = sbr.rel (%p303) target = $region28
        $region27: #{fft2c.1} parent=11 // pred_region
          %s307 = ssub.s32 256, 256
          %308 = vsyncadd [#allocation8], %s307
          %s309 = sshll.u32 [#allocation7], 4
          %s310 = int_to_ptr.vmem [resolvable:$true] %s309
          %315 = dma.hbm_to_vmem [thread:$0]  %s5, 256, %s310, [#allocation8], 128, 128, 8
        $region28: #{fft2c.1} parent=11 // pred_fallthru
          _
        // Predicated region
        $region29: #{fft2c.1} parent=11 // pred_check
          %p316 = pneg %p176
        $region30: #{fft2c.1} parent=11 // pred_check_branch
          %318 = sbr.rel (%p316) target = $region32
        $region31: #{fft2c.1} parent=11 // pred_region
          _
        $region32: #{fft2c.1} parent=11 // pred_fallthru
          _
        // Predicated region
        $region33: #{fft2c.1} parent=11 // pred_check
          %p319 = pneg %p197
        $region34: #{fft2c.1} parent=11 // pred_check_branch
          %321 = sbr.rel (%p319) target = $region36
        $region35: #{fft2c.1} parent=11 // pred_region
          _
        $region36: #{fft2c.1} parent=11 // pred_fallthru
          _
      $region12: #{fft2c.1} parent=5 // pred_fallthru
        _
      %p322 = scmp.lt.s32.totalorder %s19, 2
      // Predicated region
      $region37: #{fft2c.1} parent=5 // pred_check
        %p323 = pneg %p322
      $region38: #{fft2c.1} parent=5 // pred_check_branch
        %325 = sbr.rel (%p323) target = $region40
      $region39: #{fft2c.1} parent=5 // pred_region
        // Predicated region
        $region41: #{fft2c.1} parent=39 // pred_check
          %p326 = pneg %p39
        $region42: #{fft2c.1} parent=39 // pred_check_branch
          %328 = sbr.rel (%p326) target = $region44
        $region43: #{fft2c.1} parent=39 // pred_region
          %s329 = smul.u32 4, %s19
          %p330 = scmp.lt.s32.totalorder %s329, 7
          %s331 = scalar_select %p330, %s329, 7
          %s332 = smul.addr %s331, 2
          %s333 = smul.addr %s332, 8
          %s334 = scalar_lea.vmem %s0, %s333
          %s335 = smul.u32 4, %s19
        $region44: #{fft2c.1} parent=39 // pred_fallthru
          _
        // Predicated region
        $region45: #{fft2c.1} parent=39 // pred_check
          %p336 = pneg %p65
        $region46: #{fft2c.1} parent=39 // pred_check_branch
          %338 = sbr.rel (%p336) target = $region48
        $region47: #{fft2c.1} parent=39 // pred_region
          %s339 = smul.u32 4, %s19
          %p340 = scmp.lt.s32.totalorder %s339, 7
          %s341 = scalar_select %p340, %s339, 7
          %s342 = smul.addr %s341, 2
          %s343 = smul.addr %s342, 8
          %s344 = scalar_lea.vmem %s1, %s343
          %s345 = smul.u32 4, %s19
        $region48: #{fft2c.1} parent=39 // pred_fallthru
          _
      $region40: #{fft2c.1} parent=5 // pred_fallthru
        _
      %p346 = scmp.le.s32.totalorder 1, %s19
      %p347 = scmp.lt.s32.totalorder %s19, 3
      %p348 = pnand %p346, %p347
      %p349 = pneg %p348
      // Predicated region
      $region49: #{fft2c.1} parent=5 // pred_check
        _
      $region50: #{fft2c.1} parent=5 // pred_check_branch
        %351 = sbr.rel (%p348) target = $region52
      $region51: #{fft2c.1} parent=5 // pred_region
        %s352 = ssub.s32 %s19, 1
        // Predicated region
        $region53: #{fft2c.1} parent=51 // pred_check
          %p353 = pneg %p92
        $region54: #{fft2c.1} parent=51 // pred_check_branch
          %355 = sbr.rel (%p353) target = $region56
        $region55: #{fft2c.1} parent=51 // pred_region
          %356 = dma.done [#allocation3], 256
        $region56: #{fft2c.1} parent=51 // pred_fallthru
          _
        // Predicated region
        $region57: #{fft2c.1} parent=51 // pred_check
          %p357 = pneg %p113
        $region58: #{fft2c.1} parent=51 // pred_check_branch
          %359 = sbr.rel (%p357) target = $region60
        $region59: #{fft2c.1} parent=51 // pred_region
          %360 = dma.done [#allocation5], 256
        $region60: #{fft2c.1} parent=51 // pred_fallthru
          _
        // Predicated region
        $region61: #{fft2c.1} parent=51 // pred_check
          %p361 = pneg %p134
        $region62: #{fft2c.1} parent=51 // pred_check_branch
          %363 = sbr.rel (%p361) target = $region64
        $region63: #{fft2c.1} parent=51 // pred_region
          %364 = dma.done [#allocation5], 256
        $region64: #{fft2c.1} parent=51 // pred_fallthru
          _
        // Predicated region
        $region65: #{fft2c.1} parent=51 // pred_check
          %p365 = pneg %p155
        $region66: #{fft2c.1} parent=51 // pred_check_branch
          %367 = sbr.rel (%p365) target = $region68
        $region67: #{fft2c.1} parent=51 // pred_region
          %368 = dma.done [#allocation8], 256
        $region68: #{fft2c.1} parent=51 // pred_fallthru
          _
        %s369 = smul.u32 4, %s24
        %p370 = scmp.lt.s32.totalorder %s369, 7
        %s371 = scalar_select %p370, %s369, 7
        %s372 = smul.addr %s371, 2
        %s373 = smul.addr %s372, 8
        %s374 = scalar_lea.vmem %s0, %s373
        %p375 = pneg %p45
        %p376 = pneg %p42
        %s377 = smul.u32 4, %s24
        %p378 = scmp.lt.s32.totalorder %s377, 7
        %s379 = scalar_select %p378, %s377, 7
        %s380 = smul.addr %s379, 2
        %s381 = smul.addr %s380, 8
        %s382 = scalar_lea.vmem %s1, %s381
        %p383 = pneg %p71
        %p384 = pneg %p68
        %p385 = pneg %p92
        %p386 = pneg %p89
        %p387 = pneg %p113
        %p388 = pneg %p110
        %p389 = pneg %p134
        %p390 = pneg %p131
        %p391 = pneg %p155
        %p392 = pneg %p152
        %p393 = pneg %p176
        %p394 = pneg %p173
        %p395 = pneg %p197
        %p396 = pneg %p194
        %p397 = pneg %p223
        %p398 = pneg %p220
        %s399 = smul.u32 4, %s24
        %p400 = scmp.lt.s32.totalorder %s399, 7
        %s401 = scalar_select %p400, %s399, 7
        %s402 = smul.addr %s401, 2
        %s403 = smul.addr %s402, 8
        %s404 = scalar_lea.vmem %s8, %s403
        %p405 = pneg %p249
        %p406 = pneg %p246
        %s407 = smul.u32 4, %s24
        %p408 = scmp.lt.s32.totalorder %s407, 7
        %s409 = scalar_select %p408, %s407, 7
        %s410 = smul.addr %s409, 2
        %s411 = smul.addr %s410, 8
        %s412 = scalar_lea.vmem %s9, %s411
        %s413 = smul.u32 4, %s24
        %p414 = scmp.lt.s32.totalorder %s413, 7
        %s415 = scalar_select %p414, %s413, 7
        %s416 = smul.addr %s415, 2
        %s417 = smul.addr %s416, 8
        %s418 = scalar_lea.vmem %s0, %s417
        %s419 = smul.u32 4, %s24
        %s420 = smul.u32 4, %s24
        %p421 = scmp.lt.s32.totalorder %s420, 7
        %s422 = scalar_select %p421, %s420, 7
        %s423 = smul.addr %s422, 2
        %s424 = smul.addr %s423, 8
        %s425 = scalar_lea.vmem %s1, %s424
        %s426 = smul.u32 4, %s24
        %s427 = smul.u32 4, %s24
        %p428 = scmp.lt.s32.totalorder %s427, 7
        %s429 = scalar_select %p428, %s427, 7
        %s430 = smul.addr %s429, 2
        %s431 = smul.addr %s430, 8
        %s432 = scalar_lea.vmem %s8, %s431
        %s433 = smul.u32 4, %s24
        %s434 = smul.u32 4, %s24
        %p435 = scmp.lt.s32.totalorder %s434, 7
        %s436 = scalar_select %p435, %s434, 7
        %s437 = smul.addr %s436, 2
        %s438 = smul.addr %s437, 8
        %s439 = scalar_lea.vmem %s9, %s438
        %s440 = smul.u32 4, %s24
        %v441 = vld [vmem:[%s418] sm:$0xff]
        %v442 = vld [vmem:[%s418 + $0x8] sm:$0xff]
        %v443 = vld [vmem:[%s418 + $0x10] sm:$0xff]
        %v444 = vld [vmem:[%s418 + $0x18] sm:$0xff]
        %v445 = vld [vmem:[%s418 + $0x20] sm:$0xff]
        %v446 = vld [vmem:[%s418 + $0x28] sm:$0xff]
        %v447 = vld [vmem:[%s418 + $0x30] sm:$0xff]
        %v448 = vld [vmem:[%s418 + $0x38] sm:$0xff]
        %v449 = vld [vmem:[%s425] sm:$0xff]
        %v450 = vld [vmem:[%s425 + $0x8] sm:$0xff]
        %v451 = vld [vmem:[%s425 + $0x10] sm:$0xff]
        %v452 = vld [vmem:[%s425 + $0x18] sm:$0xff]
        %v453 = vld [vmem:[%s425 + $0x20] sm:$0xff]
        %v454 = vld [vmem:[%s425 + $0x28] sm:$0xff]
        %v455 = vld [vmem:[%s425 + $0x30] sm:$0xff]
        %v456 = vld [vmem:[%s425 + $0x38] sm:$0xff]
        %v457 = vadd.f32 %v441, %v449
        %v458 = vadd.f32 %v442, %v450
        %v459 = vadd.f32 %v443, %v451
        %v460 = vadd.f32 %v444, %v452
        %v461 = vadd.f32 %v445, %v453
        %v462 = vadd.f32 %v446, %v454
        %v463 = vadd.f32 %v447, %v455
        %v464 = vadd.f32 %v448, %v456
        %v465 = vld [vmem:[#allocation7] sm:$0xff]
        %v466 = vld [vmem:[#allocation7 + $0x8] sm:$0xff]
        %v467 = vld [vmem:[%s6] sm:$0xff]
        %v468 = vld [vmem:[%s6 + $0x8] sm:$0xff]
        %v469 = vld [vmem:[%s7] sm:$0xff]
        %v470 = vld [vmem:[%s7 + $0x8] sm:$0xff]
        %vm471 = vcmask 130048
        %v473 = vsel %vm471, %v441, 0
        %v476 = vsel %vm471, %v442, 0
        %v479 = vsel %vm471, %v443, 0
        %v482 = vsel %vm471, %v444, 0
        %v485 = vsel %vm471, %v445, 0
        %v488 = vsel %vm471, %v446, 0
        %v491 = vsel %vm471, %v447, 0
        %v494 = vsel %vm471, %v448, 0
        %496 = vmatprep.subr.mxu0 0.0
        %497 = vmatpush1.msra.mxu0 %v465
        %498 = vmatprep.subr.mxu0 0.0
        %499 = vmatpush1.msra.mxu0 %v466
        %500 = vmatprep.subr.mxu0 0.0
        %501 = vmatpush1.msra.mxu0 0.0
        %502 = vmatprep.subr.mxu0 0.0
        %503 = vmatpush1.msra.mxu0 0.0
        %504 = vmatprep.subr.mxu0 0.0
        %505 = vmatpush1.msra.mxu0 0.0
        %506 = vmatprep.subr.mxu0 0.0
        %507 = vmatpush1.msra.mxu0 0.0
        %508 = vmatprep.subr.mxu0 0.0
        %509 = vmatpush1.msra.mxu0 0.0
        %510 = vmatprep.subr.mxu0 0.0
        %511 = vmatpush1.msra.mxu0 0.0
        %512 = vmatprep.subr.mxu0 0.0
        %513 = vmatpush1.msra.mxu0 0.0
        %514 = vmatprep.subr.mxu0 0.0
        %515 = vmatpush1.msra.mxu0 0.0
        %516 = vmatprep.subr.mxu0 0.0
        %517 = vmatpush1.msra.mxu0 0.0
        %518 = vmatprep.subr.mxu0 0.0
        %519 = vmatpush1.msra.mxu0 0.0
        %520 = vmatprep.subr.mxu0 0.0
        %521 = vmatpush1.msra.mxu0 0.0
        %522 = vmatprep.subr.mxu0 0.0
        %523 = vmatpush1.msra.mxu0 0.0
        %524 = vmatprep.subr.mxu0 0.0
        %525 = vmatpush1.msra.mxu0 0.0
        %526 = vmatprep.subr.mxu0 0.0
        %527 = vmatpush1.msra.mxu0 0.0
        %528 = vmatprep.subr.mxu0 0.0
        %529 = vmatpush1.msra.mxu0 0.0
        %530 = vmatprep.subr.mxu0 0.0
        %531 = vmatpush1.msra.mxu0 0.0
        %532 = vmatprep.subr.mxu0 0.0
        %533 = vmatpush1.msra.mxu0 0.0
        %534 = vmatprep.subr.mxu0 0.0
        %535 = vmatpush1.msra.mxu0 0.0
        %536 = vmatprep.subr.mxu0 0.0
        %537 = vmatpush1.msra.mxu0 0.0
        %538 = vmatprep.subr.mxu0 0.0
        %539 = vmatpush1.msra.mxu0 0.0
        %540 = vmatprep.subr.mxu0 0.0
        %541 = vmatpush1.msra.mxu0 0.0
        %542 = vmatprep.subr.mxu0 0.0
        %543 = vmatpush1.msra.mxu0 0.0
        %544 = vmatprep.subr.mxu0 0.0
        %545 = vmatpush1.msra.mxu0 0.0
        %546 = vmatprep.subr.mxu0 0.0
        %547 = vmatpush1.msra.mxu0 0.0
        %548 = vmatprep.subr.mxu0 0.0
        %549 = vmatpush1.msra.mxu0 0.0
        %550 = vmatprep.subr.mxu0 0.0
        %551 = vmatpush1.msra.mxu0 0.0
        %552 = vmatprep.subr.mxu0 0.0
        %553 = vmatpush1.msra.mxu0 0.0
        %554 = vmatprep.subr.mxu0 0.0
        %555 = vmatpush1.msra.mxu0 0.0
        %556 = vmatprep.subr.mxu0 0.0
        %557 = vmatpush1.msra.mxu0 0.0
        %558 = vmatprep.subr.mxu0 0.0
        %559 = vmatpush1.msra.mxu0 0.0
        %560 = vmatprep.mubr.f32.mxu0 0.0
        %561 = vmatmul.mubr.f32.gmra.mrb[0].mxu0 %v473
        %v562 = vpop.f32.mrb[0].mxu0
        %v563 = vadd.f32 0.0, %v562
        %v564 = vpop.f32.mrb[0].mxu0
        %565 = vmatprep.mubr.f32.mxu0 0.0
        %566 = vmatmul.mubr.f32.gmra.mrb[0].mxu0 %v476
        %v567 = vpop.f32.mrb[0].mxu0
        %v568 = vadd.f32 0.0, %v567
        %v569 = vpop.f32.mrb[0].mxu0
        %570 = vmatprep.mubr.f32.mxu0 0.0
        %571 = vmatmul.mubr.f32.gmra.mrb[0].mxu0 %v479
        %v572 = vpop.f32.mrb[0].mxu0
        %v573 = vadd.f32 0.0, %v572
        %v574 = vpop.f32.mrb[0].mxu0
        %575 = vmatprep.mubr.f32.mxu0 0.0
        %576 = vmatmul.mubr.f32.gmra.mrb[0].mxu0 %v482
        %v577 = vpop.f32.mrb[0].mxu0
        %v578 = vadd.f32 0.0, %v577
        %v579 = vpop.f32.mrb[0].mxu0
        %580 = vmatprep.mubr.f32.mxu0 0.0
        %581 = vmatmul.mubr.f32.gmra.mrb[0].mxu0 %v485
        %v582 = vpop.f32.mrb[0].mxu0
        %v583 = vadd.f32 0.0, %v582
        %v584 = vpop.f32.mrb[0].mxu0
        %585 = vmatprep.mubr.f32.mxu0 0.0
        %586 = vmatmul.mubr.f32.gmra.mrb[0].mxu0 %v488
        %v587 = vpop.f32.mrb[0].mxu0
        %v588 = vadd.f32 0.0, %v587
        %v589 = vpop.f32.mrb[0].mxu0
        %590 = vmatprep.mubr.f32.mxu0 0.0
        %591 = vmatmul.mubr.f32.gmra.mrb[0].mxu0 %v491
        %v592 = vpop.f32.mrb[0].mxu0
        %v593 = vadd.f32 0.0, %v592
        %v594 = vpop.f32.mrb[0].mxu0
        %595 = vmatprep.mubr.f32.mxu0 0.0
        %596 = vmatmul.mubr.f32.gmra.mrb[0].mxu0 %v494
        %v597 = vpop.f32.mrb[0].mxu0
        %v598 = vadd.f32 0.0, %v597
        %v599 = vpop.f32.mrb[0].mxu0
        %600 = vdwg.mxu0
        %v602 = vsel %vm471, %v449, 0
        %v605 = vsel %vm471, %v450, 0
        %v608 = vsel %vm471, %v451, 0
        %v611 = vsel %vm471, %v452, 0
        %v614 = vsel %vm471, %v453, 0
        %v617 = vsel %vm471, %v454, 0
        %v620 = vsel %vm471, %v455, 0
        %v623 = vsel %vm471, %v456, 0
        %625 = vmatprep.subr.mxu0 0.0
        %626 = vmatpush1.msra.mxu0 %v467
        %627 = vmatprep.subr.mxu0 0.0
        %628 = vmatpush1.msra.mxu0 %v468
        %629 = vmatprep.subr.mxu0 0.0
        %630 = vmatpush1.msra.mxu0 0.0
        %631 = vmatprep.subr.mxu0 0.0
        %632 = vmatpush1.msra.mxu0 0.0
        %633 = vmatprep.subr.mxu0 0.0
        %634 = vmatpush1.msra.mxu0 0.0
        %635 = vmatprep.subr.mxu0 0.0
        %636 = vmatpush1.msra.mxu0 0.0
        %637 = vmatprep.subr.mxu0 0.0
        %638 = vmatpush1.msra.mxu0 0.0
        %639 = vmatprep.subr.mxu0 0.0
        %640 = vmatpush1.msra.mxu0 0.0
        %641 = vmatprep.subr.mxu0 0.0
        %642 = vmatpush1.msra.mxu0 0.0
        %643 = vmatprep.subr.mxu0 0.0
        %644 = vmatpush1.msra.mxu0 0.0
        %645 = vmatprep.subr.mxu0 0.0
        %646 = vmatpush1.msra.mxu0 0.0
        %647 = vmatprep.subr.mxu0 0.0
        %648 = vmatpush1.msra.mxu0 0.0
        %649 = vmatprep.subr.mxu0 0.0
        %650 = vmatpush1.msra.mxu0 0.0
        %651 = vmatprep.subr.mxu0 0.0
        %652 = vmatpush1.msra.mxu0 0.0
        %653 = vmatprep.subr.mxu0 0.0
        %654 = vmatpush1.msra.mxu0 0.0
        %655 = vmatprep.subr.mxu0 0.0
        %656 = vmatpush1.msra.mxu0 0.0
        %657 = vmatprep.subr.mxu0 0.0
        %658 = vmatpush1.msra.mxu0 0.0
        %659 = vmatprep.subr.mxu0 0.0
        %660 = vmatpush1.msra.mxu0 0.0
        %661 = vmatprep.subr.mxu0 0.0
        %662 = vmatpush1.msra.mxu0 0.0
        %663 = vmatprep.subr.mxu0 0.0
        %664 = vmatpush1.msra.mxu0 0.0
        %665 = vmatprep.subr.mxu0 0.0
        %666 = vmatpush1.msra.mxu0 0.0
        %667 = vmatprep.subr.mxu0 0.0
        %668 = vmatpush1.msra.mxu0 0.0
        %669 = vmatprep.subr.mxu0 0.0
        %670 = vmatpush1.msra.mxu0 0.0
        %671 = vmatprep.subr.mxu0 0.0
        %672 = vmatpush1.msra.mxu0 0.0
        %673 = vmatprep.subr.mxu0 0.0
        %674 = vmatpush1.msra.mxu0 0.0
        %675 = vmatprep.subr.mxu0 0.0
        %676 = vmatpush1.msra.mxu0 0.0
        %677 = vmatprep.subr.mxu0 0.0
        %678 = vmatpush1.msra.mxu0 0.0
        %679 = vmatprep.subr.mxu0 0.0
        %680 = vmatpush1.msra.mxu0 0.0
        %681 = vmatprep.subr.mxu0 0.0
        %682 = vmatpush1.msra.mxu0 0.0
        %683 = vmatprep.subr.mxu0 0.0
        %684 = vmatpush1.msra.mxu0 0.0
        %685 = vmatprep.subr.mxu0 0.0
        %686 = vmatpush1.msra.mxu0 0.0
        %687 = vmatprep.subr.mxu0 0.0
        %688 = vmatpush1.msra.mxu0 0.0
        %689 = vmatprep.mubr.f32.mxu0 0.0
        %690 = vmatmul.mubr.f32.gmra.mrb[0].mxu0 %v602
        %v691 = vpop.f32.mrb[0].mxu0
        %v692 = vadd.f32 0.0, %v691
        %v693 = vpop.f32.mrb[0].mxu0
        %694 = vmatprep.mubr.f32.mxu0 0.0
        %695 = vmatmul.mubr.f32.gmra.mrb[0].mxu0 %v605
        %v696 = vpop.f32.mrb[0].mxu0
        %v697 = vadd.f32 0.0, %v696
        %v698 = vpop.f32.mrb[0].mxu0
        %699 = vmatprep.mubr.f32.mxu0 0.0
        %700 = vmatmul.mubr.f32.gmra.mrb[0].mxu0 %v608
        %v701 = vpop.f32.mrb[0].mxu0
        %v702 = vadd.f32 0.0, %v701
        %v703 = vpop.f32.mrb[0].mxu0
        %704 = vmatprep.mubr.f32.mxu0 0.0
        %705 = vmatmul.mubr.f32.gmra.mrb[0].mxu0 %v611
        %v706 = vpop.f32.mrb[0].mxu0
        %v707 = vadd.f32 0.0, %v706
        %v708 = vpop.f32.mrb[0].mxu0
        %709 = vmatprep.mubr.f32.mxu0 0.0
        %710 = vmatmul.mubr.f32.gmra.mrb[0].mxu0 %v614
        %v711 = vpop.f32.mrb[0].mxu0
        %v712 = vadd.f32 0.0, %v711
        %v713 = vpop.f32.mrb[0].mxu0
        %714 = vmatprep.mubr.f32.mxu0 0.0
        %715 = vmatmul.mubr.f32.gmra.mrb[0].mxu0 %v617
        %v716 = vpop.f32.mrb[0].mxu0
        %v717 = vadd.f32 0.0, %v716
        %v718 = vpop.f32.mrb[0].mxu0
        %719 = vmatprep.mubr.f32.mxu0 0.0
        %720 = vmatmul.mubr.f32.gmra.mrb[0].mxu0 %v620
        %v721 = vpop.f32.mrb[0].mxu0
        %v722 = vadd.f32 0.0, %v721
        %v723 = vpop.f32.mrb[0].mxu0
        %724 = vmatprep.mubr.f32.mxu0 0.0
        %725 = vmatmul.mubr.f32.gmra.mrb[0].mxu0 %v623
        %v726 = vpop.f32.mrb[0].mxu0
        %v727 = vadd.f32 0.0, %v726
        %v728 = vpop.f32.mrb[0].mxu0
        %729 = vdwg.mxu0
        %v731 = vsel %vm471, %v457, 0
        %v734 = vsel %vm471, %v458, 0
        %v737 = vsel %vm471, %v459, 0
        %v740 = vsel %vm471, %v460, 0
        %v743 = vsel %vm471, %v461, 0
        %v746 = vsel %vm471, %v462, 0
        %v749 = vsel %vm471, %v463, 0
        %v752 = vsel %vm471, %v464, 0
        %754 = vmatprep.subr.mxu0 0.0
        %755 = vmatpush1.msra.mxu0 %v469
        %756 = vmatprep.subr.mxu0 0.0
        %757 = vmatpush1.msra.mxu0 %v470
        %758 = vmatprep.subr.mxu0 0.0
        %759 = vmatpush1.msra.mxu0 0.0
        %760 = vmatprep.subr.mxu0 0.0
        %761 = vmatpush1.msra.mxu0 0.0
        %762 = vmatprep.subr.mxu0 0.0
        %763 = vmatpush1.msra.mxu0 0.0
        %764 = vmatprep.subr.mxu0 0.0
        %765 = vmatpush1.msra.mxu0 0.0
        %766 = vmatprep.subr.mxu0 0.0
        %767 = vmatpush1.msra.mxu0 0.0
        %768 = vmatprep.subr.mxu0 0.0
        %769 = vmatpush1.msra.mxu0 0.0
        %770 = vmatprep.subr.mxu0 0.0
        %771 = vmatpush1.msra.mxu0 0.0
        %772 = vmatprep.subr.mxu0 0.0
        %773 = vmatpush1.msra.mxu0 0.0
        %774 = vmatprep.subr.mxu0 0.0
        %775 = vmatpush1.msra.mxu0 0.0
        %776 = vmatprep.subr.mxu0 0.0
        %777 = vmatpush1.msra.mxu0 0.0
        %778 = vmatprep.subr.mxu0 0.0
        %779 = vmatpush1.msra.mxu0 0.0
        %780 = vmatprep.subr.mxu0 0.0
        %781 = vmatpush1.msra.mxu0 0.0
        %782 = vmatprep.subr.mxu0 0.0
        %783 = vmatpush1.msra.mxu0 0.0
        %784 = vmatprep.subr.mxu0 0.0
        %785 = vmatpush1.msra.mxu0 0.0
        %786 = vmatprep.subr.mxu0 0.0
        %787 = vmatpush1.msra.mxu0 0.0
        %788 = vmatprep.subr.mxu0 0.0
        %789 = vmatpush1.msra.mxu0 0.0
        %790 = vmatprep.subr.mxu0 0.0
        %791 = vmatpush1.msra.mxu0 0.0
        %792 = vmatprep.subr.mxu0 0.0
        %793 = vmatpush1.msra.mxu0 0.0
        %794 = vmatprep.subr.mxu0 0.0
        %795 = vmatpush1.msra.mxu0 0.0
        %796 = vmatprep.subr.mxu0 0.0
        %797 = vmatpush1.msra.mxu0 0.0
        %798 = vmatprep.subr.mxu0 0.0
        %799 = vmatpush1.msra.mxu0 0.0
        %800 = vmatprep.subr.mxu0 0.0
        %801 = vmatpush1.msra.mxu0 0.0
        %802 = vmatprep.subr.mxu0 0.0
        %803 = vmatpush1.msra.mxu0 0.0
        %804 = vmatprep.subr.mxu0 0.0
        %805 = vmatpush1.msra.mxu0 0.0
        %806 = vmatprep.subr.mxu0 0.0
        %807 = vmatpush1.msra.mxu0 0.0
        %808 = vmatprep.subr.mxu0 0.0
        %809 = vmatpush1.msra.mxu0 0.0
        %810 = vmatprep.subr.mxu0 0.0
        %811 = vmatpush1.msra.mxu0 0.0
        %812 = vmatprep.subr.mxu0 0.0
        %813 = vmatpush1.msra.mxu0 0.0
        %814 = vmatprep.subr.mxu0 0.0
        %815 = vmatpush1.msra.mxu0 0.0
        %816 = vmatprep.subr.mxu0 0.0
        %817 = vmatpush1.msra.mxu0 0.0
        %818 = vmatprep.mubr.f32.mxu0 0.0
        %819 = vmatmul.mubr.f32.gmra.mrb[0].mxu0 %v731
        %v820 = vpop.f32.mrb[0].mxu0
        %v821 = vadd.f32 0.0, %v820
        %v822 = vpop.f32.mrb[0].mxu0
        %823 = vmatprep.mubr.f32.mxu0 0.0
        %824 = vmatmul.mubr.f32.gmra.mrb[0].mxu0 %v734
        %v825 = vpop.f32.mrb[0].mxu0
        %v826 = vadd.f32 0.0, %v825
        %v827 = vpop.f32.mrb[0].mxu0
        %828 = vmatprep.mubr.f32.mxu0 0.0
        %829 = vmatmul.mubr.f32.gmra.mrb[0].mxu0 %v737
        %v830 = vpop.f32.mrb[0].mxu0
        %v831 = vadd.f32 0.0, %v830
        %v832 = vpop.f32.mrb[0].mxu0
        %833 = vmatprep.mubr.f32.mxu0 0.0
        %834 = vmatmul.mubr.f32.gmra.mrb[0].mxu0 %v740
        %v835 = vpop.f32.mrb[0].mxu0
        %v836 = vadd.f32 0.0, %v835
        %v837 = vpop.f32.mrb[0].mxu0
        %838 = vmatprep.mubr.f32.mxu0 0.0
        %839 = vmatmul.mubr.f32.gmra.mrb[0].mxu0 %v743
        %v840 = vpop.f32.mrb[0].mxu0
        %v841 = vadd.f32 0.0, %v840
        %v842 = vpop.f32.mrb[0].mxu0
        %843 = vmatprep.mubr.f32.mxu0 0.0
        %844 = vmatmul.mubr.f32.gmra.mrb[0].mxu0 %v746
        %v845 = vpop.f32.mrb[0].mxu0
        %v846 = vadd.f32 0.0, %v845
        %v847 = vpop.f32.mrb[0].mxu0
        %848 = vmatprep.mubr.f32.mxu0 0.0
        %849 = vmatmul.mubr.f32.gmra.mrb[0].mxu0 %v749
        %v850 = vpop.f32.mrb[0].mxu0
        %v851 = vadd.f32 0.0, %v850
        %v852 = vpop.f32.mrb[0].mxu0
        %853 = vmatprep.mubr.f32.mxu0 0.0
        %854 = vmatmul.mubr.f32.gmra.mrb[0].mxu0 %v752
        %v855 = vpop.f32.mrb[0].mxu0
        %v856 = vadd.f32 0.0, %v855
        %v857 = vpop.f32.mrb[0].mxu0
        %858 = vdwg.mxu0
        %v859 = vsub.f32 %v563, %v692
        %v860 = vsub.f32 %v568, %v697
        %v861 = vsub.f32 %v573, %v702
        %v862 = vsub.f32 %v578, %v707
        %v863 = vsub.f32 %v583, %v712
        %v864 = vsub.f32 %v588, %v717
        %v865 = vsub.f32 %v593, %v722
        %v866 = vsub.f32 %v598, %v727
        %v867 = vsub.f32 %v821, %v563
        %v868 = vsub.f32 %v826, %v568
        %v869 = vsub.f32 %v831, %v573
        %v870 = vsub.f32 %v836, %v578
        %v871 = vsub.f32 %v841, %v583
        %v872 = vsub.f32 %v846, %v588
        %v873 = vsub.f32 %v851, %v593
        %v874 = vsub.f32 %v856, %v598
        %v875 = vsub.f32 %v867, %v692
        %v876 = vsub.f32 %v868, %v697
        %v877 = vsub.f32 %v869, %v702
        %v878 = vsub.f32 %v870, %v707
        %v879 = vsub.f32 %v871, %v712
        %v880 = vsub.f32 %v872, %v717
        %v881 = vsub.f32 %v873, %v722
        %v882 = vsub.f32 %v874, %v727
        %v883 = vadd.f32 %v859, %v875
        %v884 = vadd.f32 %v860, %v876
        %v885 = vadd.f32 %v861, %v877
        %v886 = vadd.f32 %v862, %v878
        %v887 = vadd.f32 %v863, %v879
        %v888 = vadd.f32 %v864, %v880
        %v889 = vadd.f32 %v865, %v881
        %v890 = vadd.f32 %v866, %v882
        %v891 = vld [vmem:[#allocation2] sm:$0xff]
        %v892 = vld [vmem:[#allocation2 + $0x8] sm:$0xff]
        %v893 = vld [vmem:[#allocation4] sm:$0xff]
        %v894 = vld [vmem:[#allocation4 + $0x8] sm:$0xff]
        %v895 = vld [vmem:[#allocation6] sm:$0xff]
        %v896 = vld [vmem:[#allocation6 + $0x8] sm:$0xff]
        %v898 = vsel %vm471, %v891, 0
        %v901 = vsel %vm471, %v892, 0
        %903 = vmatprep.subr.mxu0 0.0
        %904 = vmatpush1.msra.mxu0 %v859
        %905 = vmatprep.subr.mxu0 0.0
        %906 = vmatpush1.msra.mxu0 %v860
        %907 = vmatprep.subr.mxu0 0.0
        %908 = vmatpush1.msra.mxu0 0.0
        %909 = vmatprep.subr.mxu0 0.0
        %910 = vmatpush1.msra.mxu0 0.0
        %911 = vmatprep.subr.mxu0 0.0
        %912 = vmatpush1.msra.mxu0 0.0
        %913 = vmatprep.subr.mxu0 0.0
        %914 = vmatpush1.msra.mxu0 0.0
        %915 = vmatprep.subr.mxu0 0.0
        %916 = vmatpush1.msra.mxu0 0.0
        %917 = vmatprep.subr.mxu0 0.0
        %918 = vmatpush1.msra.mxu0 0.0
        %919 = vmatprep.subr.mxu0 0.0
        %920 = vmatpush1.msra.mxu0 0.0
        %921 = vmatprep.subr.mxu0 0.0
        %922 = vmatpush1.msra.mxu0 0.0
        %923 = vmatprep.subr.mxu0 0.0
        %924 = vmatpush1.msra.mxu0 0.0
        %925 = vmatprep.subr.mxu0 0.0
        %926 = vmatpush1.msra.mxu0 0.0
        %927 = vmatprep.subr.mxu0 0.0
        %928 = vmatpush1.msra.mxu0 0.0
        %929 = vmatprep.subr.mxu0 0.0
        %930 = vmatpush1.msra.mxu0 0.0
        %931 = vmatprep.subr.mxu0 0.0
        %932 = vmatpush1.msra.mxu0 0.0
        %933 = vmatprep.subr.mxu0 0.0
        %934 = vmatpush1.msra.mxu0 0.0
        %935 = vmatprep.subr.mxu0 0.0
        %936 = vmatpush1.msra.mxu0 0.0
        %937 = vmatprep.subr.mxu0 0.0
        %938 = vmatpush1.msra.mxu0 0.0
        %939 = vmatprep.subr.mxu0 0.0
        %940 = vmatpush1.msra.mxu0 0.0
        %941 = vmatprep.subr.mxu0 0.0
        %942 = vmatpush1.msra.mxu0 0.0
        %943 = vmatprep.subr.mxu0 0.0
        %944 = vmatpush1.msra.mxu0 0.0
        %945 = vmatprep.subr.mxu0 0.0
        %946 = vmatpush1.msra.mxu0 0.0
        %947 = vmatprep.subr.mxu0 0.0
        %948 = vmatpush1.msra.mxu0 0.0
        %949 = vmatprep.subr.mxu0 0.0
        %950 = vmatpush1.msra.mxu0 0.0
        %951 = vmatprep.subr.mxu0 0.0
        %952 = vmatpush1.msra.mxu0 0.0
        %953 = vmatprep.subr.mxu0 0.0
        %954 = vmatpush1.msra.mxu0 0.0
        %955 = vmatprep.subr.mxu0 0.0
        %956 = vmatpush1.msra.mxu0 0.0
        %957 = vmatprep.subr.mxu0 0.0
        %958 = vmatpush1.msra.mxu0 0.0
        %959 = vmatprep.subr.mxu0 0.0
        %960 = vmatpush1.msra.mxu0 0.0
        %961 = vmatprep.subr.mxu0 0.0
        %962 = vmatpush1.msra.mxu0 0.0
        %963 = vmatprep.subr.mxu0 0.0
        %964 = vmatpush1.msra.mxu0 0.0
        %965 = vmatprep.subr.mxu0 0.0
        %966 = vmatpush1.msra.mxu0 0.0
        %967 = vmatprep.mubr.f32.mxu0 0.0
        %968 = vmatmul.mubr.f32.gmra.mrb[0].mxu0 %v898
        %v969 = vpop.f32.mrb[0].mxu0
        %v970 = vadd.f32 0.0, %v969
        %v971 = vpop.f32.mrb[0].mxu0
        %972 = vmatprep.mubr.f32.mxu0 0.0
        %973 = vmatmul.mubr.f32.gmra.mrb[0].mxu0 %v901
        %v974 = vpop.f32.mrb[0].mxu0
        %v975 = vadd.f32 0.0, %v974
        %v976 = vpop.f32.mrb[0].mxu0
        %977 = vdwg.mxu0
        %978 = vmatprep.subr.mxu0 0.0
        %979 = vmatpush1.msra.mxu0 %v861
        %980 = vmatprep.subr.mxu0 0.0
        %981 = vmatpush1.msra.mxu0 %v862
        %982 = vmatprep.subr.mxu0 0.0
        %983 = vmatpush1.msra.mxu0 0.0
        %984 = vmatprep.subr.mxu0 0.0
        %985 = vmatpush1.msra.mxu0 0.0
        %986 = vmatprep.subr.mxu0 0.0
        %987 = vmatpush1.msra.mxu0 0.0
        %988 = vmatprep.subr.mxu0 0.0
        %989 = vmatpush1.msra.mxu0 0.0
        %990 = vmatprep.subr.mxu0 0.0
        %991 = vmatpush1.msra.mxu0 0.0
        %992 = vmatprep.subr.mxu0 0.0
        %993 = vmatpush1.msra.mxu0 0.0
        %994 = vmatprep.subr.mxu0 0.0
        %995 = vmatpush1.msra.mxu0 0.0
        %996 = vmatprep.subr.mxu0 0.0
        %997 = vmatpush1.msra.mxu0 0.0
        %998 = vmatprep.subr.mxu0 0.0
        %999 = vmatpush1.msra.mxu0 0.0
        %1000 = vmatprep.subr.mxu0 0.0
        %1001 = vmatpush1.msra.mxu0 0.0
        %1002 = vmatprep.subr.mxu0 0.0
        %1003 = vmatpush1.msra.mxu0 0.0
        %1004 = vmatprep.subr.mxu0 0.0
        %1005 = vmatpush1.msra.mxu0 0.0
        %1006 = vmatprep.subr.mxu0 0.0
        %1007 = vmatpush1.msra.mxu0 0.0
        %1008 = vmatprep.subr.mxu0 0.0
        %1009 = vmatpush1.msra.mxu0 0.0
        %1010 = vmatprep.subr.mxu0 0.0
        %1011 = vmatpush1.msra.mxu0 0.0
        %1012 = vmatprep.subr.mxu0 0.0
        %1013 = vmatpush1.msra.mxu0 0.0
        %1014 = vmatprep.subr.mxu0 0.0
        %1015 = vmatpush1.msra.mxu0 0.0
        %1016 = vmatprep.subr.mxu0 0.0
        %1017 = vmatpush1.msra.mxu0 0.0
        %1018 = vmatprep.subr.mxu0 0.0
        %1019 = vmatpush1.msra.mxu0 0.0
        %1020 = vmatprep.subr.mxu0 0.0
        %1021 = vmatpush1.msra.mxu0 0.0
        %1022 = vmatprep.subr.mxu0 0.0
        %1023 = vmatpush1.msra.mxu0 0.0
        %1024 = vmatprep.subr.mxu0 0.0
        %1025 = vmatpush1.msra.mxu0 0.0
        %1026 = vmatprep.subr.mxu0 0.0
        %1027 = vmatpush1.msra.mxu0 0.0
        %1028 = vmatprep.subr.mxu0 0.0
        %1029 = vmatpush1.msra.mxu0 0.0
        %1030 = vmatprep.subr.mxu0 0.0
        %1031 = vmatpush1.msra.mxu0 0.0
        %1032 = vmatprep.subr.mxu0 0.0
        %1033 = vmatpush1.msra.mxu0 0.0
        %1034 = vmatprep.subr.mxu0 0.0
        %1035 = vmatpush1.msra.mxu0 0.0
        %1036 = vmatprep.subr.mxu0 0.0
        %1037 = vmatpush1.msra.mxu0 0.0
        %1038 = vmatprep.subr.mxu0 0.0
        %1039 = vmatpush1.msra.mxu0 0.0
        %1040 = vmatprep.subr.mxu0 0.0
        %1041 = vmatpush1.msra.mxu0 0.0
        %1042 = vmatprep.mubr.f32.mxu0 0.0
        %1043 = vmatmul.mubr.f32.gmra.mrb[0].mxu0 %v898
        %v1044 = vpop.f32.mrb[0].mxu0
        %v1045 = vadd.f32 0.0, %v1044
        %v1046 = vpop.f32.mrb[0].mxu0
        %1047 = vmatprep.mubr.f32.mxu0 0.0
        %1048 = vmatmul.mubr.f32.gmra.mrb[0].mxu0 %v901
        %v1049 = vpop.f32.mrb[0].mxu0
        %v1050 = vadd.f32 0.0, %v1049
        %v1051 = vpop.f32.mrb[0].mxu0
        %1052 = vdwg.mxu0
        %1053 = vmatprep.subr.mxu0 0.0
        %1054 = vmatpush1.msra.mxu0 %v863
        %1055 = vmatprep.subr.mxu0 0.0
        %1056 = vmatpush1.msra.mxu0 %v864
        %1057 = vmatprep.subr.mxu0 0.0
        %1058 = vmatpush1.msra.mxu0 0.0
        %1059 = vmatprep.subr.mxu0 0.0
        %1060 = vmatpush1.msra.mxu0 0.0
        %1061 = vmatprep.subr.mxu0 0.0
        %1062 = vmatpush1.msra.mxu0 0.0
        %1063 = vmatprep.subr.mxu0 0.0
        %1064 = vmatpush1.msra.mxu0 0.0
        %1065 = vmatprep.subr.mxu0 0.0
        %1066 = vmatpush1.msra.mxu0 0.0
        %1067 = vmatprep.subr.mxu0 0.0
        %1068 = vmatpush1.msra.mxu0 0.0
        %1069 = vmatprep.subr.mxu0 0.0
        %1070 = vmatpush1.msra.mxu0 0.0
        %1071 = vmatprep.subr.mxu0 0.0
        %1072 = vmatpush1.msra.mxu0 0.0
        %1073 = vmatprep.subr.mxu0 0.0
        %1074 = vmatpush1.msra.mxu0 0.0
        %1075 = vmatprep.subr.mxu0 0.0
        %1076 = vmatpush1.msra.mxu0 0.0
        %1077 = vmatprep.subr.mxu0 0.0
        %1078 = vmatpush1.msra.mxu0 0.0
        %1079 = vmatprep.subr.mxu0 0.0
        %1080 = vmatpush1.msra.mxu0 0.0
        %1081 = vmatprep.subr.mxu0 0.0
        %1082 = vmatpush1.msra.mxu0 0.0
        %1083 = vmatprep.subr.mxu0 0.0
        %1084 = vmatpush1.msra.mxu0 0.0
        %1085 = vmatprep.subr.mxu0 0.0
        %1086 = vmatpush1.msra.mxu0 0.0
        %1087 = vmatprep.subr.mxu0 0.0
        %1088 = vmatpush1.msra.mxu0 0.0
        %1089 = vmatprep.subr.mxu0 0.0
        %1090 = vmatpush1.msra.mxu0 0.0
        %1091 = vmatprep.subr.mxu0 0.0
        %1092 = vmatpush1.msra.mxu0 0.0
        %1093 = vmatprep.subr.mxu0 0.0
        %1094 = vmatpush1.msra.mxu0 0.0
        %1095 = vmatprep.subr.mxu0 0.0
        %1096 = vmatpush1.msra.mxu0 0.0
        %1097 = vmatprep.subr.mxu0 0.0
        %1098 = vmatpush1.msra.mxu0 0.0
        %1099 = vmatprep.subr.mxu0 0.0
        %1100 = vmatpush1.msra.mxu0 0.0
        %1101 = vmatprep.subr.mxu0 0.0
        %1102 = vmatpush1.msra.mxu0 0.0
        %1103 = vmatprep.subr.mxu0 0.0
        %1104 = vmatpush1.msra.mxu0 0.0
        %1105 = vmatprep.subr.mxu0 0.0
        %1106 = vmatpush1.msra.mxu0 0.0
        %1107 = vmatprep.subr.mxu0 0.0
        %1108 = vmatpush1.msra.mxu0 0.0
        %1109 = vmatprep.subr.mxu0 0.0
        %1110 = vmatpush1.msra.mxu0 0.0
        %1111 = vmatprep.subr.mxu0 0.0
        %1112 = vmatpush1.msra.mxu0 0.0
        %1113 = vmatprep.subr.mxu0 0.0
        %1114 = vmatpush1.msra.mxu0 0.0
        %1115 = vmatprep.subr.mxu0 0.0
        %1116 = vmatpush1.msra.mxu0 0.0
        %1117 = vmatprep.mubr.f32.mxu0 0.0
        %1118 = vmatmul.mubr.f32.gmra.mrb[0].mxu0 %v898
        %v1119 = vpop.f32.mrb[0].mxu0
        %v1120 = vadd.f32 0.0, %v1119
        %v1121 = vpop.f32.mrb[0].mxu0
        %1122 = vmatprep.mubr.f32.mxu0 0.0
        %1123 = vmatmul.mubr.f32.gmra.mrb[0].mxu0 %v901
        %v1124 = vpop.f32.mrb[0].mxu0
        %v1125 = vadd.f32 0.0, %v1124
        %v1126 = vpop.f32.mrb[0].mxu0
        %1127 = vdwg.mxu0
        %1128 = vmatprep.subr.mxu0 0.0
        %1129 = vmatpush1.msra.mxu0 %v865
        %1130 = vmatprep.subr.mxu0 0.0
        %1131 = vmatpush1.msra.mxu0 %v866
        %1132 = vmatprep.subr.mxu0 0.0
        %1133 = vmatpush1.msra.mxu0 0.0
        %1134 = vmatprep.subr.mxu0 0.0
        %1135 = vmatpush1.msra.mxu0 0.0
        %1136 = vmatprep.subr.mxu0 0.0
        %1137 = vmatpush1.msra.mxu0 0.0
        %1138 = vmatprep.subr.mxu0 0.0
        %1139 = vmatpush1.msra.mxu0 0.0
        %1140 = vmatprep.subr.mxu0 0.0
        %1141 = vmatpush1.msra.mxu0 0.0
        %1142 = vmatprep.subr.mxu0 0.0
        %1143 = vmatpush1.msra.mxu0 0.0
        %1144 = vmatprep.subr.mxu0 0.0
        %1145 = vmatpush1.msra.mxu0 0.0
        %1146 = vmatprep.subr.mxu0 0.0
        %1147 = vmatpush1.msra.mxu0 0.0
        %1148 = vmatprep.subr.mxu0 0.0
        %1149 = vmatpush1.msra.mxu0 0.0
        %1150 = vmatprep.subr.mxu0 0.0
        %1151 = vmatpush1.msra.mxu0 0.0
        %1152 = vmatprep.subr.mxu0 0.0
        %1153 = vmatpush1.msra.mxu0 0.0
        %1154 = vmatprep.subr.mxu0 0.0
        %1155 = vmatpush1.msra.mxu0 0.0
        %1156 = vmatprep.subr.mxu0 0.0
        %1157 = vmatpush1.msra.mxu0 0.0
        %1158 = vmatprep.subr.mxu0 0.0
        %1159 = vmatpush1.msra.mxu0 0.0
        %1160 = vmatprep.subr.mxu0 0.0
        %1161 = vmatpush1.msra.mxu0 0.0
        %1162 = vmatprep.subr.mxu0 0.0
        %1163 = vmatpush1.msra.mxu0 0.0
        %1164 = vmatprep.subr.mxu0 0.0
        %1165 = vmatpush1.msra.mxu0 0.0
        %1166 = vmatprep.subr.mxu0 0.0
        %1167 = vmatpush1.msra.mxu0 0.0
        %1168 = vmatprep.subr.mxu0 0.0
        %1169 = vmatpush1.msra.mxu0 0.0
        %1170 = vmatprep.subr.mxu0 0.0
        %1171 = vmatpush1.msra.mxu0 0.0
        %1172 = vmatprep.subr.mxu0 0.0
        %1173 = vmatpush1.msra.mxu0 0.0
        %1174 = vmatprep.subr.mxu0 0.0
        %1175 = vmatpush1.msra.mxu0 0.0
        %1176 = vmatprep.subr.mxu0 0.0
        %1177 = vmatpush1.msra.mxu0 0.0
        %1178 = vmatprep.subr.mxu0 0.0
        %1179 = vmatpush1.msra.mxu0 0.0
        %1180 = vmatprep.subr.mxu0 0.0
        %1181 = vmatpush1.msra.mxu0 0.0
        %1182 = vmatprep.subr.mxu0 0.0
        %1183 = vmatpush1.msra.mxu0 0.0
        %1184 = vmatprep.subr.mxu0 0.0
        %1185 = vmatpush1.msra.mxu0 0.0
        %1186 = vmatprep.subr.mxu0 0.0
        %1187 = vmatpush1.msra.mxu0 0.0
        %1188 = vmatprep.subr.mxu0 0.0
        %1189 = vmatpush1.msra.mxu0 0.0
        %1190 = vmatprep.subr.mxu0 0.0
        %1191 = vmatpush1.msra.mxu0 0.0
        %1192 = vmatprep.mubr.f32.mxu0 0.0
        %1193 = vmatmul.mubr.f32.gmra.mrb[0].mxu0 %v898
        %v1194 = vpop.f32.mrb[0].mxu0
        %v1195 = vadd.f32 0.0, %v1194
        %v1196 = vpop.f32.mrb[0].mxu0
        %1197 = vmatprep.mubr.f32.mxu0 0.0
        %1198 = vmatmul.mubr.f32.gmra.mrb[0].mxu0 %v901
        %v1199 = vpop.f32.mrb[0].mxu0
        %v1200 = vadd.f32 0.0, %v1199
        %v1201 = vpop.f32.mrb[0].mxu0
        %1202 = vdwg.mxu0
        %v1204 = vsel %vm471, %v893, 0
        %v1207 = vsel %vm471, %v894, 0
        %1209 = vmatprep.subr.mxu0 0.0
        %1210 = vmatpush1.msra.mxu0 %v875
        %1211 = vmatprep.subr.mxu0 0.0
        %1212 = vmatpush1.msra.mxu0 %v876
        %1213 = vmatprep.subr.mxu0 0.0
        %1214 = vmatpush1.msra.mxu0 0.0
        %1215 = vmatprep.subr.mxu0 0.0
        %1216 = vmatpush1.msra.mxu0 0.0
        %1217 = vmatprep.subr.mxu0 0.0
        %1218 = vmatpush1.msra.mxu0 0.0
        %1219 = vmatprep.subr.mxu0 0.0
        %1220 = vmatpush1.msra.mxu0 0.0
        %1221 = vmatprep.subr.mxu0 0.0
        %1222 = vmatpush1.msra.mxu0 0.0
        %1223 = vmatprep.subr.mxu0 0.0
        %1224 = vmatpush1.msra.mxu0 0.0
        %1225 = vmatprep.subr.mxu0 0.0
        %1226 = vmatpush1.msra.mxu0 0.0
        %1227 = vmatprep.subr.mxu0 0.0
        %1228 = vmatpush1.msra.mxu0 0.0
        %1229 = vmatprep.subr.mxu0 0.0
        %1230 = vmatpush1.msra.mxu0 0.0
        %1231 = vmatprep.subr.mxu0 0.0
        %1232 = vmatpush1.msra.mxu0 0.0
        %1233 = vmatprep.subr.mxu0 0.0
        %1234 = vmatpush1.msra.mxu0 0.0
        %1235 = vmatprep.subr.mxu0 0.0
        %1236 = vmatpush1.msra.mxu0 0.0
        %1237 = vmatprep.subr.mxu0 0.0
        %1238 = vmatpush1.msra.mxu0 0.0
        %1239 = vmatprep.subr.mxu0 0.0
        %1240 = vmatpush1.msra.mxu0 0.0
        %1241 = vmatprep.subr.mxu0 0.0
        %1242 = vmatpush1.msra.mxu0 0.0
        %1243 = vmatprep.subr.mxu0 0.0
        %1244 = vmatpush1.msra.mxu0 0.0
        %1245 = vmatprep.subr.mxu0 0.0
        %1246 = vmatpush1.msra.mxu0 0.0
        %1247 = vmatprep.subr.mxu0 0.0
        %1248 = vmatpush1.msra.mxu0 0.0
        %1249 = vmatprep.subr.mxu0 0.0
        %1250 = vmatpush1.msra.mxu0 0.0
        %1251 = vmatprep.subr.mxu0 0.0
        %1252 = vmatpush1.msra.mxu0 0.0
        %1253 = vmatprep.subr.mxu0 0.0
        %1254 = vmatpush1.msra.mxu0 0.0
        %1255 = vmatprep.subr.mxu0 0.0
        %1256 = vmatpush1.msra.mxu0 0.0
        %1257 = vmatprep.subr.mxu0 0.0
        %1258 = vmatpush1.msra.mxu0 0.0
        %1259 = vmatprep.subr.mxu0 0.0
        %1260 = vmatpush1.msra.mxu0 0.0
        %1261 = vmatprep.subr.mxu0 0.0
        %1262 = vmatpush1.msra.mxu0 0.0
        %1263 = vmatprep.subr.mxu0 0.0
        %1264 = vmatpush1.msra.mxu0 0.0
        %1265 = vmatprep.subr.mxu0 0.0
        %1266 = vmatpush1.msra.mxu0 0.0
        %1267 = vmatprep.subr.mxu0 0.0
        %1268 = vmatpush1.msra.mxu0 0.0
        %1269 = vmatprep.subr.mxu0 0.0
        %1270 = vmatpush1.msra.mxu0 0.0
        %1271 = vmatprep.subr.mxu0 0.0
        %1272 = vmatpush1.msra.mxu0 0.0
        %1273 = vmatprep.mubr.f32.mxu0 0.0
        %1274 = vmatmul.mubr.f32.gmra.mrb[0].mxu0 %v1204
        %v1275 = vpop.f32.mrb[0].mxu0
        %v1276 = vadd.f32 0.0, %v1275
        %v1277 = vpop.f32.mrb[0].mxu0
        %1278 = vmatprep.mubr.f32.mxu0 0.0
        %1279 = vmatmul.mubr.f32.gmra.mrb[0].mxu0 %v1207
        %v1280 = vpop.f32.mrb[0].mxu0
        %v1281 = vadd.f32 0.0, %v1280
        %v1282 = vpop.f32.mrb[0].mxu0
        %1283 = vdwg.mxu0
        %1284 = vmatprep.subr.mxu0 0.0
        %1285 = vmatpush1.msra.mxu0 %v877
        %1286 = vmatprep.subr.mxu0 0.0
        %1287 = vmatpush1.msra.mxu0 %v878
        %1288 = vmatprep.subr.mxu0 0.0
        %1289 = vmatpush1.msra.mxu0 0.0
        %1290 = vmatprep.subr.mxu0 0.0
        %1291 = vmatpush1.msra.mxu0 0.0
        %1292 = vmatprep.subr.mxu0 0.0
        %1293 = vmatpush1.msra.mxu0 0.0
        %1294 = vmatprep.subr.mxu0 0.0
        %1295 = vmatpush1.msra.mxu0 0.0
        %1296 = vmatprep.subr.mxu0 0.0
        %1297 = vmatpush1.msra.mxu0 0.0
        %1298 = vmatprep.subr.mxu0 0.0
        %1299 = vmatpush1.msra.mxu0 0.0
        %1300 = vmatprep.subr.mxu0 0.0
        %1301 = vmatpush1.msra.mxu0 0.0
        %1302 = vmatprep.subr.mxu0 0.0
        %1303 = vmatpush1.msra.mxu0 0.0
        %1304 = vmatprep.subr.mxu0 0.0
        %1305 = vmatpush1.msra.mxu0 0.0
        %1306 = vmatprep.subr.mxu0 0.0
        %1307 = vmatpush1.msra.mxu0 0.0
        %1308 = vmatprep.subr.mxu0 0.0
        %1309 = vmatpush1.msra.mxu0 0.0
        %1310 = vmatprep.subr.mxu0 0.0
        %1311 = vmatpush1.msra.mxu0 0.0
        %1312 = vmatprep.subr.mxu0 0.0
        %1313 = vmatpush1.msra.mxu0 0.0
        %1314 = vmatprep.subr.mxu0 0.0
        %1315 = vmatpush1.msra.mxu0 0.0
        %1316 = vmatprep.subr.mxu0 0.0
        %1317 = vmatpush1.msra.mxu0 0.0
        %1318 = vmatprep.subr.mxu0 0.0
        %1319 = vmatpush1.msra.mxu0 0.0
        %1320 = vmatprep.subr.mxu0 0.0
        %1321 = vmatpush1.msra.mxu0 0.0
        %1322 = vmatprep.subr.mxu0 0.0
        %1323 = vmatpush1.msra.mxu0 0.0
        %1324 = vmatprep.subr.mxu0 0.0
        %1325 = vmatpush1.msra.mxu0 0.0
        %1326 = vmatprep.subr.mxu0 0.0
        %1327 = vmatpush1.msra.mxu0 0.0
        %1328 = vmatprep.subr.mxu0 0.0
        %1329 = vmatpush1.msra.mxu0 0.0
        %1330 = vmatprep.subr.mxu0 0.0
        %1331 = vmatpush1.msra.mxu0 0.0
        %1332 = vmatprep.subr.mxu0 0.0
        %1333 = vmatpush1.msra.mxu0 0.0
        %1334 = vmatprep.subr.mxu0 0.0
        %1335 = vmatpush1.msra.mxu0 0.0
        %1336 = vmatprep.subr.mxu0 0.0
        %1337 = vmatpush1.msra.mxu0 0.0
        %1338 = vmatprep.subr.mxu0 0.0
        %1339 = vmatpush1.msra.mxu0 0.0
        %1340 = vmatprep.subr.mxu0 0.0
        %1341 = vmatpush1.msra.mxu0 0.0
        %1342 = vmatprep.subr.mxu0 0.0
        %1343 = vmatpush1.msra.mxu0 0.0
        %1344 = vmatprep.subr.mxu0 0.0
        %1345 = vmatpush1.msra.mxu0 0.0
        %1346 = vmatprep.subr.mxu0 0.0
        %1347 = vmatpush1.msra.mxu0 0.0
        %1348 = vmatprep.mubr.f32.mxu0 0.0
        %1349 = vmatmul.mubr.f32.gmra.mrb[0].mxu0 %v1204
        %v1350 = vpop.f32.mrb[0].mxu0
        %v1351 = vadd.f32 0.0, %v1350
        %v1352 = vpop.f32.mrb[0].mxu0
        %1353 = vmatprep.mubr.f32.mxu0 0.0
        %1354 = vmatmul.mubr.f32.gmra.mrb[0].mxu0 %v1207
        %v1355 = vpop.f32.mrb[0].mxu0
        %v1356 = vadd.f32 0.0, %v1355
        %v1357 = vpop.f32.mrb[0].mxu0
        %1358 = vdwg.mxu0
        %1359 = vmatprep.subr.mxu0 0.0
        %1360 = vmatpush1.msra.mxu0 %v879
        %1361 = vmatprep.subr.mxu0 0.0
        %1362 = vmatpush1.msra.mxu0 %v880
        %1363 = vmatprep.subr.mxu0 0.0
        %1364 = vmatpush1.msra.mxu0 0.0
        %1365 = vmatprep.subr.mxu0 0.0
        %1366 = vmatpush1.msra.mxu0 0.0
        %1367 = vmatprep.subr.mxu0 0.0
        %1368 = vmatpush1.msra.mxu0 0.0
        %1369 = vmatprep.subr.mxu0 0.0
        %1370 = vmatpush1.msra.mxu0 0.0
        %1371 = vmatprep.subr.mxu0 0.0
        %1372 = vmatpush1.msra.mxu0 0.0
        %1373 = vmatprep.subr.mxu0 0.0
        %1374 = vmatpush1.msra.mxu0 0.0
        %1375 = vmatprep.subr.mxu0 0.0
        %1376 = vmatpush1.msra.mxu0 0.0
        %1377 = vmatprep.subr.mxu0 0.0
        %1378 = vmatpush1.msra.mxu0 0.0
        %1379 = vmatprep.subr.mxu0 0.0
        %1380 = vmatpush1.msra.mxu0 0.0
        %1381 = vmatprep.subr.mxu0 0.0
        %1382 = vmatpush1.msra.mxu0 0.0
        %1383 = vmatprep.subr.mxu0 0.0
        %1384 = vmatpush1.msra.mxu0 0.0
        %1385 = vmatprep.subr.mxu0 0.0
        %1386 = vmatpush1.msra.mxu0 0.0
        %1387 = vmatprep.subr.mxu0 0.0
        %1388 = vmatpush1.msra.mxu0 0.0
        %1389 = vmatprep.subr.mxu0 0.0
        %1390 = vmatpush1.msra.mxu0 0.0
        %1391 = vmatprep.subr.mxu0 0.0
        %1392 = vmatpush1.msra.mxu0 0.0
        %1393 = vmatprep.subr.mxu0 0.0
        %1394 = vmatpush1.msra.mxu0 0.0
        %1395 = vmatprep.subr.mxu0 0.0
        %1396 = vmatpush1.msra.mxu0 0.0
        %1397 = vmatprep.subr.mxu0 0.0
        %1398 = vmatpush1.msra.mxu0 0.0
        %1399 = vmatprep.subr.mxu0 0.0
        %1400 = vmatpush1.msra.mxu0 0.0
        %1401 = vmatprep.subr.mxu0 0.0
        %1402 = vmatpush1.msra.mxu0 0.0
        %1403 = vmatprep.subr.mxu0 0.0
        %1404 = vmatpush1.msra.mxu0 0.0
        %1405 = vmatprep.subr.mxu0 0.0
        %1406 = vmatpush1.msra.mxu0 0.0
        %1407 = vmatprep.subr.mxu0 0.0
        %1408 = vmatpush1.msra.mxu0 0.0
        %1409 = vmatprep.subr.mxu0 0.0
        %1410 = vmatpush1.msra.mxu0 0.0
        %1411 = vmatprep.subr.mxu0 0.0
        %1412 = vmatpush1.msra.mxu0 0.0
        %1413 = vmatprep.subr.mxu0 0.0
        %1414 = vmatpush1.msra.mxu0 0.0
        %1415 = vmatprep.subr.mxu0 0.0
        %1416 = vmatpush1.msra.mxu0 0.0
        %1417 = vmatprep.subr.mxu0 0.0
        %1418 = vmatpush1.msra.mxu0 0.0
        %1419 = vmatprep.subr.mxu0 0.0
        %1420 = vmatpush1.msra.mxu0 0.0
        %1421 = vmatprep.subr.mxu0 0.0
        %1422 = vmatpush1.msra.mxu0 0.0
        %1423 = vmatprep.mubr.f32.mxu0 0.0
        %1424 = vmatmul.mubr.f32.gmra.mrb[0].mxu0 %v1204
        %v1425 = vpop.f32.mrb[0].mxu0
        %v1426 = vadd.f32 0.0, %v1425
        %v1427 = vpop.f32.mrb[0].mxu0
        %1428 = vmatprep.mubr.f32.mxu0 0.0
        %1429 = vmatmul.mubr.f32.gmra.mrb[0].mxu0 %v1207
        %v1430 = vpop.f32.mrb[0].mxu0
        %v1431 = vadd.f32 0.0, %v1430
        %v1432 = vpop.f32.mrb[0].mxu0
        %1433 = vdwg.mxu0
        %1434 = vmatprep.subr.mxu0 0.0
        %1435 = vmatpush1.msra.mxu0 %v881
        %1436 = vmatprep.subr.mxu0 0.0
        %1437 = vmatpush1.msra.mxu0 %v882
        %1438 = vmatprep.subr.mxu0 0.0
        %1439 = vmatpush1.msra.mxu0 0.0
        %1440 = vmatprep.subr.mxu0 0.0
        %1441 = vmatpush1.msra.mxu0 0.0
        %1442 = vmatprep.subr.mxu0 0.0
        %1443 = vmatpush1.msra.mxu0 0.0
        %1444 = vmatprep.subr.mxu0 0.0
        %1445 = vmatpush1.msra.mxu0 0.0
        %1446 = vmatprep.subr.mxu0 0.0
        %1447 = vmatpush1.msra.mxu0 0.0
        %1448 = vmatprep.subr.mxu0 0.0
        %1449 = vmatpush1.msra.mxu0 0.0
        %1450 = vmatprep.subr.mxu0 0.0
        %1451 = vmatpush1.msra.mxu0 0.0
        %1452 = vmatprep.subr.mxu0 0.0
        %1453 = vmatpush1.msra.mxu0 0.0
        %1454 = vmatprep.subr.mxu0 0.0
        %1455 = vmatpush1.msra.mxu0 0.0
        %1456 = vmatprep.subr.mxu0 0.0
        %1457 = vmatpush1.msra.mxu0 0.0
        %1458 = vmatprep.subr.mxu0 0.0
        %1459 = vmatpush1.msra.mxu0 0.0
        %1460 = vmatprep.subr.mxu0 0.0
        %1461 = vmatpush1.msra.mxu0 0.0
        %1462 = vmatprep.subr.mxu0 0.0
        %1463 = vmatpush1.msra.mxu0 0.0
        %1464 = vmatprep.subr.mxu0 0.0
        %1465 = vmatpush1.msra.mxu0 0.0
        %1466 = vmatprep.subr.mxu0 0.0
        %1467 = vmatpush1.msra.mxu0 0.0
        %1468 = vmatprep.subr.mxu0 0.0
        %1469 = vmatpush1.msra.mxu0 0.0
        %1470 = vmatprep.subr.mxu0 0.0
        %1471 = vmatpush1.msra.mxu0 0.0
        %1472 = vmatprep.subr.mxu0 0.0
        %1473 = vmatpush1.msra.mxu0 0.0
        %1474 = vmatprep.subr.mxu0 0.0
        %1475 = vmatpush1.msra.mxu0 0.0
        %1476 = vmatprep.subr.mxu0 0.0
        %1477 = vmatpush1.msra.mxu0 0.0
        %1478 = vmatprep.subr.mxu0 0.0
        %1479 = vmatpush1.msra.mxu0 0.0
        %1480 = vmatprep.subr.mxu0 0.0
        %1481 = vmatpush1.msra.mxu0 0.0
        %1482 = vmatprep.subr.mxu0 0.0
        %1483 = vmatpush1.msra.mxu0 0.0
        %1484 = vmatprep.subr.mxu0 0.0
        %1485 = vmatpush1.msra.mxu0 0.0
        %1486 = vmatprep.subr.mxu0 0.0
        %1487 = vmatpush1.msra.mxu0 0.0
        %1488 = vmatprep.subr.mxu0 0.0
        %1489 = vmatpush1.msra.mxu0 0.0
        %1490 = vmatprep.subr.mxu0 0.0
        %1491 = vmatpush1.msra.mxu0 0.0
        %1492 = vmatprep.subr.mxu0 0.0
        %1493 = vmatpush1.msra.mxu0 0.0
        %1494 = vmatprep.subr.mxu0 0.0
        %1495 = vmatpush1.msra.mxu0 0.0
        %1496 = vmatprep.subr.mxu0 0.0
        %1497 = vmatpush1.msra.mxu0 0.0
        %1498 = vmatprep.mubr.f32.mxu0 0.0
        %1499 = vmatmul.mubr.f32.gmra.mrb[0].mxu0 %v1204
        %v1500 = vpop.f32.mrb[0].mxu0
        %v1501 = vadd.f32 0.0, %v1500
        %v1502 = vpop.f32.mrb[0].mxu0
        %1503 = vmatprep.mubr.f32.mxu0 0.0
        %1504 = vmatmul.mubr.f32.gmra.mrb[0].mxu0 %v1207
        %v1505 = vpop.f32.mrb[0].mxu0
        %v1506 = vadd.f32 0.0, %v1505
        %v1507 = vpop.f32.mrb[0].mxu0
        %1508 = vdwg.mxu0
        %v1510 = vsel %vm471, %v895, 0
        %v1513 = vsel %vm471, %v896, 0
        %1515 = vmatprep.subr.mxu0 0.0
        %1516 = vmatpush1.msra.mxu0 %v883
        %1517 = vmatprep.subr.mxu0 0.0
        %1518 = vmatpush1.msra.mxu0 %v884
        %1519 = vmatprep.subr.mxu0 0.0
        %1520 = vmatpush1.msra.mxu0 0.0
        %1521 = vmatprep.subr.mxu0 0.0
        %1522 = vmatpush1.msra.mxu0 0.0
        %1523 = vmatprep.subr.mxu0 0.0
        %1524 = vmatpush1.msra.mxu0 0.0
        %1525 = vmatprep.subr.mxu0 0.0
        %1526 = vmatpush1.msra.mxu0 0.0
        %1527 = vmatprep.subr.mxu0 0.0
        %1528 = vmatpush1.msra.mxu0 0.0
        %1529 = vmatprep.subr.mxu0 0.0
        %1530 = vmatpush1.msra.mxu0 0.0
        %1531 = vmatprep.subr.mxu0 0.0
        %1532 = vmatpush1.msra.mxu0 0.0
        %1533 = vmatprep.subr.mxu0 0.0
        %1534 = vmatpush1.msra.mxu0 0.0
        %1535 = vmatprep.subr.mxu0 0.0
        %1536 = vmatpush1.msra.mxu0 0.0
        %1537 = vmatprep.subr.mxu0 0.0
        %1538 = vmatpush1.msra.mxu0 0.0
        %1539 = vmatprep.subr.mxu0 0.0
        %1540 = vmatpush1.msra.mxu0 0.0
        %1541 = vmatprep.subr.mxu0 0.0
        %1542 = vmatpush1.msra.mxu0 0.0
        %1543 = vmatprep.subr.mxu0 0.0
        %1544 = vmatpush1.msra.mxu0 0.0
        %1545 = vmatprep.subr.mxu0 0.0
        %1546 = vmatpush1.msra.mxu0 0.0
        %1547 = vmatprep.subr.mxu0 0.0
        %1548 = vmatpush1.msra.mxu0 0.0
        %1549 = vmatprep.subr.mxu0 0.0
        %1550 = vmatpush1.msra.mxu0 0.0
        %1551 = vmatprep.subr.mxu0 0.0
        %1552 = vmatpush1.msra.mxu0 0.0
        %1553 = vmatprep.subr.mxu0 0.0
        %1554 = vmatpush1.msra.mxu0 0.0
        %1555 = vmatprep.subr.mxu0 0.0
        %1556 = vmatpush1.msra.mxu0 0.0
        %1557 = vmatprep.subr.mxu0 0.0
        %1558 = vmatpush1.msra.mxu0 0.0
        %1559 = vmatprep.subr.mxu0 0.0
        %1560 = vmatpush1.msra.mxu0 0.0
        %1561 = vmatprep.subr.mxu0 0.0
        %1562 = vmatpush1.msra.mxu0 0.0
        %1563 = vmatprep.subr.mxu0 0.0
        %1564 = vmatpush1.msra.mxu0 0.0
        %1565 = vmatprep.subr.mxu0 0.0
        %1566 = vmatpush1.msra.mxu0 0.0
        %1567 = vmatprep.subr.mxu0 0.0
        %1568 = vmatpush1.msra.mxu0 0.0
        %1569 = vmatprep.subr.mxu0 0.0
        %1570 = vmatpush1.msra.mxu0 0.0
        %1571 = vmatprep.subr.mxu0 0.0
        %1572 = vmatpush1.msra.mxu0 0.0
        %1573 = vmatprep.subr.mxu0 0.0
        %1574 = vmatpush1.msra.mxu0 0.0
        %1575 = vmatprep.subr.mxu0 0.0
        %1576 = vmatpush1.msra.mxu0 0.0
        %1577 = vmatprep.subr.mxu0 0.0
        %1578 = vmatpush1.msra.mxu0 0.0
        %1579 = vmatprep.mubr.f32.mxu0 0.0
        %1580 = vmatmul.mubr.f32.gmra.mrb[0].mxu0 %v1510
        %v1581 = vpop.f32.mrb[0].mxu0
        %v1582 = vadd.f32 0.0, %v1581
        %v1583 = vpop.f32.mrb[0].mxu0
        %1584 = vmatprep.mubr.f32.mxu0 0.0
        %1585 = vmatmul.mubr.f32.gmra.mrb[0].mxu0 %v1513
        %v1586 = vpop.f32.mrb[0].mxu0
        %v1587 = vadd.f32 0.0, %v1586
        %v1588 = vpop.f32.mrb[0].mxu0
        %1589 = vdwg.mxu0
        %1590 = vmatprep.subr.mxu0 0.0
        %1591 = vmatpush1.msra.mxu0 %v885
        %1592 = vmatprep.subr.mxu0 0.0
        %1593 = vmatpush1.msra.mxu0 %v886
        %1594 = vmatprep.subr.mxu0 0.0
        %1595 = vmatpush1.msra.mxu0 0.0
        %1596 = vmatprep.subr.mxu0 0.0
        %1597 = vmatpush1.msra.mxu0 0.0
        %1598 = vmatprep.subr.mxu0 0.0
        %1599 = vmatpush1.msra.mxu0 0.0
        %1600 = vmatprep.subr.mxu0 0.0
        %1601 = vmatpush1.msra.mxu0 0.0
        %1602 = vmatprep.subr.mxu0 0.0
        %1603 = vmatpush1.msra.mxu0 0.0
        %1604 = vmatprep.subr.mxu0 0.0
        %1605 = vmatpush1.msra.mxu0 0.0
        %1606 = vmatprep.subr.mxu0 0.0
        %1607 = vmatpush1.msra.mxu0 0.0
        %1608 = vmatprep.subr.mxu0 0.0
        %1609 = vmatpush1.msra.mxu0 0.0
        %1610 = vmatprep.subr.mxu0 0.0
        %1611 = vmatpush1.msra.mxu0 0.0
        %1612 = vmatprep.subr.mxu0 0.0
        %1613 = vmatpush1.msra.mxu0 0.0
        %1614 = vmatprep.subr.mxu0 0.0
        %1615 = vmatpush1.msra.mxu0 0.0
        %1616 = vmatprep.subr.mxu0 0.0
        %1617 = vmatpush1.msra.mxu0 0.0
        %1618 = vmatprep.subr.mxu0 0.0
        %1619 = vmatpush1.msra.mxu0 0.0
        %1620 = vmatprep.subr.mxu0 0.0
        %1621 = vmatpush1.msra.mxu0 0.0
        %1622 = vmatprep.subr.mxu0 0.0
        %1623 = vmatpush1.msra.mxu0 0.0
        %1624 = vmatprep.subr.mxu0 0.0
        %1625 = vmatpush1.msra.mxu0 0.0
        %1626 = vmatprep.subr.mxu0 0.0
        %1627 = vmatpush1.msra.mxu0 0.0
        %1628 = vmatprep.subr.mxu0 0.0
        %1629 = vmatpush1.msra.mxu0 0.0
        %1630 = vmatprep.subr.mxu0 0.0
        %1631 = vmatpush1.msra.mxu0 0.0
        %1632 = vmatprep.subr.mxu0 0.0
        %1633 = vmatpush1.msra.mxu0 0.0
        %1634 = vmatprep.subr.mxu0 0.0
        %1635 = vmatpush1.msra.mxu0 0.0
        %1636 = vmatprep.subr.mxu0 0.0
        %1637 = vmatpush1.msra.mxu0 0.0
        %1638 = vmatprep.subr.mxu0 0.0
        %1639 = vmatpush1.msra.mxu0 0.0
        %1640 = vmatprep.subr.mxu0 0.0
        %1641 = vmatpush1.msra.mxu0 0.0
        %1642 = vmatprep.subr.mxu0 0.0
        %1643 = vmatpush1.msra.mxu0 0.0
        %1644 = vmatprep.subr.mxu0 0.0
        %1645 = vmatpush1.msra.mxu0 0.0
        %1646 = vmatprep.subr.mxu0 0.0
        %1647 = vmatpush1.msra.mxu0 0.0
        %1648 = vmatprep.subr.mxu0 0.0
        %1649 = vmatpush1.msra.mxu0 0.0
        %1650 = vmatprep.subr.mxu0 0.0
        %1651 = vmatpush1.msra.mxu0 0.0
        %1652 = vmatprep.subr.mxu0 0.0
        %1653 = vmatpush1.msra.mxu0 0.0
        %1654 = vmatprep.mubr.f32.mxu0 0.0
        %1655 = vmatmul.mubr.f32.gmra.mrb[0].mxu0 %v1510
        %v1656 = vpop.f32.mrb[0].mxu0
        %v1657 = vadd.f32 0.0, %v1656
        %v1658 = vpop.f32.mrb[0].mxu0
        %1659 = vmatprep.mubr.f32.mxu0 0.0
        %1660 = vmatmul.mubr.f32.gmra.mrb[0].mxu0 %v1513
        %v1661 = vpop.f32.mrb[0].mxu0
        %v1662 = vadd.f32 0.0, %v1661
        %v1663 = vpop.f32.mrb[0].mxu0
        %1664 = vdwg.mxu0
        %1665 = vmatprep.subr.mxu0 0.0
        %1666 = vmatpush1.msra.mxu0 %v887
        %1667 = vmatprep.subr.mxu0 0.0
        %1668 = vmatpush1.msra.mxu0 %v888
        %1669 = vmatprep.subr.mxu0 0.0
        %1670 = vmatpush1.msra.mxu0 0.0
        %1671 = vmatprep.subr.mxu0 0.0
        %1672 = vmatpush1.msra.mxu0 0.0
        %1673 = vmatprep.subr.mxu0 0.0
        %1674 = vmatpush1.msra.mxu0 0.0
        %1675 = vmatprep.subr.mxu0 0.0
        %1676 = vmatpush1.msra.mxu0 0.0
        %1677 = vmatprep.subr.mxu0 0.0
        %1678 = vmatpush1.msra.mxu0 0.0
        %1679 = vmatprep.subr.mxu0 0.0
        %1680 = vmatpush1.msra.mxu0 0.0
        %1681 = vmatprep.subr.mxu0 0.0
        %1682 = vmatpush1.msra.mxu0 0.0
        %1683 = vmatprep.subr.mxu0 0.0
        %1684 = vmatpush1.msra.mxu0 0.0
        %1685 = vmatprep.subr.mxu0 0.0
        %1686 = vmatpush1.msra.mxu0 0.0
        %1687 = vmatprep.subr.mxu0 0.0
        %1688 = vmatpush1.msra.mxu0 0.0
        %1689 = vmatprep.subr.mxu0 0.0
        %1690 = vmatpush1.msra.mxu0 0.0
        %1691 = vmatprep.subr.mxu0 0.0
        %1692 = vmatpush1.msra.mxu0 0.0
        %1693 = vmatprep.subr.mxu0 0.0
        %1694 = vmatpush1.msra.mxu0 0.0
        %1695 = vmatprep.subr.mxu0 0.0
        %1696 = vmatpush1.msra.mxu0 0.0
        %1697 = vmatprep.subr.mxu0 0.0
        %1698 = vmatpush1.msra.mxu0 0.0
        %1699 = vmatprep.subr.mxu0 0.0
        %1700 = vmatpush1.msra.mxu0 0.0
        %1701 = vmatprep.subr.mxu0 0.0
        %1702 = vmatpush1.msra.mxu0 0.0
        %1703 = vmatprep.subr.mxu0 0.0
        %1704 = vmatpush1.msra.mxu0 0.0
        %1705 = vmatprep.subr.mxu0 0.0
        %1706 = vmatpush1.msra.mxu0 0.0
        %1707 = vmatprep.subr.mxu0 0.0
        %1708 = vmatpush1.msra.mxu0 0.0
        %1709 = vmatprep.subr.mxu0 0.0
        %1710 = vmatpush1.msra.mxu0 0.0
        %1711 = vmatprep.subr.mxu0 0.0
        %1712 = vmatpush1.msra.mxu0 0.0
        %1713 = vmatprep.subr.mxu0 0.0
        %1714 = vmatpush1.msra.mxu0 0.0
        %1715 = vmatprep.subr.mxu0 0.0
        %1716 = vmatpush1.msra.mxu0 0.0
        %1717 = vmatprep.subr.mxu0 0.0
        %1718 = vmatpush1.msra.mxu0 0.0
        %1719 = vmatprep.subr.mxu0 0.0
        %1720 = vmatpush1.msra.mxu0 0.0
        %1721 = vmatprep.subr.mxu0 0.0
        %1722 = vmatpush1.msra.mxu0 0.0
        %1723 = vmatprep.subr.mxu0 0.0
        %1724 = vmatpush1.msra.mxu0 0.0
        %1725 = vmatprep.subr.mxu0 0.0
        %1726 = vmatpush1.msra.mxu0 0.0
        %1727 = vmatprep.subr.mxu0 0.0
        %1728 = vmatpush1.msra.mxu0 0.0
        %1729 = vmatprep.mubr.f32.mxu0 0.0
        %1730 = vmatmul.mubr.f32.gmra.mrb[0].mxu0 %v1510
        %v1731 = vpop.f32.mrb[0].mxu0
        %v1732 = vadd.f32 0.0, %v1731
        %v1733 = vpop.f32.mrb[0].mxu0
        %1734 = vmatprep.mubr.f32.mxu0 0.0
        %1735 = vmatmul.mubr.f32.gmra.mrb[0].mxu0 %v1513
        %v1736 = vpop.f32.mrb[0].mxu0
        %v1737 = vadd.f32 0.0, %v1736
        %v1738 = vpop.f32.mrb[0].mxu0
        %1739 = vdwg.mxu0
        %1740 = vmatprep.subr.mxu0 0.0
        %1741 = vmatpush1.msra.mxu0 %v889
        %1742 = vmatprep.subr.mxu0 0.0
        %1743 = vmatpush1.msra.mxu0 %v890
        %1744 = vmatprep.subr.mxu0 0.0
        %1745 = vmatpush1.msra.mxu0 0.0
        %1746 = vmatprep.subr.mxu0 0.0
        %1747 = vmatpush1.msra.mxu0 0.0
        %1748 = vmatprep.subr.mxu0 0.0
        %1749 = vmatpush1.msra.mxu0 0.0
        %1750 = vmatprep.subr.mxu0 0.0
        %1751 = vmatpush1.msra.mxu0 0.0
        %1752 = vmatprep.subr.mxu0 0.0
        %1753 = vmatpush1.msra.mxu0 0.0
        %1754 = vmatprep.subr.mxu0 0.0
        %1755 = vmatpush1.msra.mxu0 0.0
        %1756 = vmatprep.subr.mxu0 0.0
        %1757 = vmatpush1.msra.mxu0 0.0
        %1758 = vmatprep.subr.mxu0 0.0
        %1759 = vmatpush1.msra.mxu0 0.0
        %1760 = vmatprep.subr.mxu0 0.0
        %1761 = vmatpush1.msra.mxu0 0.0
        %1762 = vmatprep.subr.mxu0 0.0
        %1763 = vmatpush1.msra.mxu0 0.0
        %1764 = vmatprep.subr.mxu0 0.0
        %1765 = vmatpush1.msra.mxu0 0.0
        %1766 = vmatprep.subr.mxu0 0.0
        %1767 = vmatpush1.msra.mxu0 0.0
        %1768 = vmatprep.subr.mxu0 0.0
        %1769 = vmatpush1.msra.mxu0 0.0
        %1770 = vmatprep.subr.mxu0 0.0
        %1771 = vmatpush1.msra.mxu0 0.0
        %1772 = vmatprep.subr.mxu0 0.0
        %1773 = vmatpush1.msra.mxu0 0.0
        %1774 = vmatprep.subr.mxu0 0.0
        %1775 = vmatpush1.msra.mxu0 0.0
        %1776 = vmatprep.subr.mxu0 0.0
        %1777 = vmatpush1.msra.mxu0 0.0
        %1778 = vmatprep.subr.mxu0 0.0
        %1779 = vmatpush1.msra.mxu0 0.0
        %1780 = vmatprep.subr.mxu0 0.0
        %1781 = vmatpush1.msra.mxu0 0.0
        %1782 = vmatprep.subr.mxu0 0.0
        %1783 = vmatpush1.msra.mxu0 0.0
        %1784 = vmatprep.subr.mxu0 0.0
        %1785 = vmatpush1.msra.mxu0 0.0
        %1786 = vmatprep.subr.mxu0 0.0
        %1787 = vmatpush1.msra.mxu0 0.0
        %1788 = vmatprep.subr.mxu0 0.0
        %1789 = vmatpush1.msra.mxu0 0.0
        %1790 = vmatprep.subr.mxu0 0.0
        %1791 = vmatpush1.msra.mxu0 0.0
        %1792 = vmatprep.subr.mxu0 0.0
        %1793 = vmatpush1.msra.mxu0 0.0
        %1794 = vmatprep.subr.mxu0 0.0
        %1795 = vmatpush1.msra.mxu0 0.0
        %1796 = vmatprep.subr.mxu0 0.0
        %1797 = vmatpush1.msra.mxu0 0.0
        %1798 = vmatprep.subr.mxu0 0.0
        %1799 = vmatpush1.msra.mxu0 0.0
        %1800 = vmatprep.subr.mxu0 0.0
        %1801 = vmatpush1.msra.mxu0 0.0
        %1802 = vmatprep.subr.mxu0 0.0
        %1803 = vmatpush1.msra.mxu0 0.0
        %1804 = vmatprep.mubr.f32.mxu0 0.0
        %1805 = vmatmul.mubr.f32.gmra.mrb[0].mxu0 %v1510
        %v1806 = vpop.f32.mrb[0].mxu0
        %v1807 = vadd.f32 0.0, %v1806
        %v1808 = vpop.f32.mrb[0].mxu0
        %1809 = vmatprep.mubr.f32.mxu0 0.0
        %1810 = vmatmul.mubr.f32.gmra.mrb[0].mxu0 %v1513
        %v1811 = vpop.f32.mrb[0].mxu0
        %v1812 = vadd.f32 0.0, %v1811
        %v1813 = vpop.f32.mrb[0].mxu0
        %1814 = vdwg.mxu0
        %v1815 = vsub.f32 %v970, %v1276
        %v1816 = vsub.f32 %v975, %v1281
        %v1817 = vsub.f32 %v1045, %v1351
        %v1818 = vsub.f32 %v1050, %v1356
        %v1819 = vsub.f32 %v1120, %v1426
        %v1820 = vsub.f32 %v1125, %v1431
        %v1821 = vsub.f32 %v1195, %v1501
        %v1822 = vsub.f32 %v1200, %v1506
        %1823 = vst.msk [vmem:[%s432] sm:$0xff] %vm471, %v1815
        %1824 = vst.msk [vmem:[%s432 + $0x8] sm:$0xff] %vm471, %v1816
        %1825 = vst.msk [vmem:[%s432 + $0x10] sm:$0xff] %vm471, %v1817
        %1826 = vst.msk [vmem:[%s432 + $0x18] sm:$0xff] %vm471, %v1818
        %1827 = vst.msk [vmem:[%s432 + $0x20] sm:$0xff] %vm471, %v1819
        %1828 = vst.msk [vmem:[%s432 + $0x28] sm:$0xff] %vm471, %v1820
        %1829 = vst.msk [vmem:[%s432 + $0x30] sm:$0xff] %vm471, %v1821
        %1830 = vst.msk [vmem:[%s432 + $0x38] sm:$0xff] %vm471, %v1822
        %v1831 = vsub.f32 %v1582, %v970
        %v1832 = vsub.f32 %v1587, %v975
        %v1833 = vsub.f32 %v1657, %v1045
        %v1834 = vsub.f32 %v1662, %v1050
        %v1835 = vsub.f32 %v1732, %v1120
        %v1836 = vsub.f32 %v1737, %v1125
        %v1837 = vsub.f32 %v1807, %v1195
        %v1838 = vsub.f32 %v1812, %v1200
        %v1839 = vsub.f32 %v1831, %v1276
        %v1840 = vsub.f32 %v1832, %v1281
        %v1841 = vsub.f32 %v1833, %v1351
        %v1842 = vsub.f32 %v1834, %v1356
        %v1843 = vsub.f32 %v1835, %v1426
        %v1844 = vsub.f32 %v1836, %v1431
        %v1845 = vsub.f32 %v1837, %v1501
        %v1846 = vsub.f32 %v1838, %v1506
        %1847 = vst.msk [vmem:[%s439] sm:$0xff] %vm471, %v1839
        %1848 = vst.msk [vmem:[%s439 + $0x8] sm:$0xff] %vm471, %v1840
        %1849 = vst.msk [vmem:[%s439 + $0x10] sm:$0xff] %vm471, %v1841
        %1850 = vst.msk [vmem:[%s439 + $0x18] sm:$0xff] %vm471, %v1842
        %1851 = vst.msk [vmem:[%s439 + $0x20] sm:$0xff] %vm471, %v1843
        %1852 = vst.msk [vmem:[%s439 + $0x28] sm:$0xff] %vm471, %v1844
        %1853 = vst.msk [vmem:[%s439 + $0x30] sm:$0xff] %vm471, %v1845
        %1854 = vst.msk [vmem:[%s439 + $0x38] sm:$0xff] %vm471, %v1846
        %s1855 = smul.u32 4, %s24
        %p1856 = scmp.lt.s32.totalorder %s1855, 7
        %s1857 = scalar_select %p1856, %s1855, 7
        %s1858 = smul.addr %s1857, 2
        %s1859 = smul.addr %s1858, 8
        %s1860 = scalar_lea.vmem %s8, %s1859
        %s1861 = smul.u32 4, %s24
        %p1862 = scmp.lt.s32.totalorder %s1861, 7
        %s1863 = scalar_select %p1862, %s1861, 7
        %s1864 = smul.addr %s1863, 2
        %s1865 = smul.addr %s1864, 8
        %s1866 = scalar_lea.vmem %s9, %s1865
        // Predicated region
        $region69: #{fft2c.1} parent=51 // pred_check
          %p1867 = pneg %p220
        $region70: #{fft2c.1} parent=51 // pred_check_branch
          %1869 = sbr.rel (%p1867) target = $region72
        $region71: #{fft2c.1} parent=51 // pred_region
          %s1870 = smul.u32 4, %s24
        $region72: #{fft2c.1} parent=51 // pred_fallthru
          _
        // Predicated region
        $region73: #{fft2c.1} parent=51 // pred_check
          %p1871 = pneg %p246
        $region74: #{fft2c.1} parent=51 // pred_check_branch
          %1873 = sbr.rel (%p1871) target = $region76
        $region75: #{fft2c.1} parent=51 // pred_region
          %s1874 = smul.u32 4, %s24
        $region76: #{fft2c.1} parent=51 // pred_fallthru
          _
      $region52: #{fft2c.1} parent=5 // pred_fallthru
        _
      %p1875 = scmp.le.s32.totalorder 2, %s19
      // Predicated region
      $region77: #{fft2c.1} parent=5 // pred_check
        %p1876 = pneg %p1875
      $region78: #{fft2c.1} parent=5 // pred_check_branch
        %1878 = sbr.rel (%p1876) target = $region80
      $region79: #{fft2c.1} parent=5 // pred_region
        %s1879 = ssub.s32 %s19, 2
        // Predicated region
        $region81: #{fft2c.1} parent=79 // pred_check
          %p1880 = pneg %p226
        $region82: #{fft2c.1} parent=79 // pred_check_branch
          %1882 = sbr.rel (%p1880) target = $region84
        $region83: #{fft2c.1} parent=79 // pred_region
          %s1883 = smul.u32 4, %s25
          %p1884 = scmp.lt.s32.totalorder %s1883, 7
          %s1885 = scalar_select %p1884, %s1883, 7
          %s1886 = smul.addr %s1885, 2
          %s1887 = smul.addr %s1886, 8
          %s1888 = scalar_lea.vmem %s8, %s1887
        $region84: #{fft2c.1} parent=79 // pred_fallthru
          _
        // Predicated region
        $region85: #{fft2c.1} parent=79 // pred_check
          %p1889 = pneg %p252
        $region86: #{fft2c.1} parent=79 // pred_check_branch
          %1891 = sbr.rel (%p1889) target = $region88
        $region87: #{fft2c.1} parent=79 // pred_region
          %s1892 = smul.u32 4, %s25
          %p1893 = scmp.lt.s32.totalorder %s1892, 7
          %s1894 = scalar_select %p1893, %s1892, 7
          %s1895 = smul.addr %s1894, 2
          %s1896 = smul.addr %s1895, 8
          %s1897 = scalar_lea.vmem %s9, %s1896
        $region88: #{fft2c.1} parent=79 // pred_fallthru
          _
      $region80: #{fft2c.1} parent=5 // pred_fallthru
        _
    $region6: #{fft2c.1} parent=1 // loop_footer
      %s23 = sadd.s32 1, %s19
    $region7: #{fft2c.1} parent=1 // loop_footer_branch
      %18 = sbr.rel target = $region3
    $region8: #{fft2c.1} parent=1 // loop_exit
      _
    %1898 = vsyncpa [#allocation3], 1
    %s1899 = scalar_lea.sflag [#allocation3], 1
    %1900 = vsyncpa %s1899, 1
    %1901 = vsyncpa [#allocation5], 1
    %1902 = vsyncpa [#allocation8], 1

</llo_original>
